<compile_context>
chip_gen: v5e
topology: v5e:2x2
jax: 0.10.0
libtpu: 0.0.40
codegen_flags: <defaults>
</compile_context>

<pallas_src>
import functools

import jax
import jax.numpy as jnp
from jax.experimental import pallas as pl
from jax.experimental.pallas import tpu as pltpu  # noqa: F401  (TPU backend import)


# ----------------------------- Pallas kernel ---------------------------------


def _layernorm(v, g, b, eps=1e-5):
    mu = jnp.mean(v, axis=-1, keepdims=True)
    var = jnp.mean((v - mu) ** 2, axis=-1, keepdims=True)
    return (v - mu) * jax.lax.rsqrt(var + eps) * g + b


def _encoder_stack_kernel(
    x_ref,        # (B, S, D)   activations
    wqkv_ref,     # (L, D, 3D)  fused QKV projection weights
    bqkv_ref,     # (L, 1, 3D)  fused QKV bias
    wo_ref,       # (L, D, D)   attention output projection
    dvec_ref,     # (L, 6, D)   packed: [bo, ln1_g, ln1_b, b2, ln2_g, ln2_b]
    w1_ref,       # (L, D, F)   FFN first linear
    b1_ref,       # (L, 1, F)
    w2_ref,       # (L, F, D)   FFN second linear
    o_ref,        # (B, S, D)
    *, num_heads, num_layers,
):
    B, S, D = x_ref.shape
    H = num_heads
    hd = D // H
    N = B * S
    scale = 1.0 / (hd ** 0.5)

    # Load the whole activation slab once and flatten batch into the row
    # (sublane) axis; it stays resident in vregs/VMEM across all layers.
    x = jnp.concatenate([x_ref[b] for b in range(B)], axis=0)          # (N, D)

    for l in range(num_layers):                  # static loop over layers (L small)
        wqkv = wqkv_ref[l]                       # (D, 3D)
        bqkv = bqkv_ref[l]                       # (1, 3D)
        wo = wo_ref[l]                           # (D, D)
        w1 = w1_ref[l]                           # (D, F)
        b1 = b1_ref[l]                           # (1, F)
        w2 = w2_ref[l]                           # (F, D)
        dv = dvec_ref[l]                         # (6, D)
        bo, g1, be1, b2, g2, be2 = (dv[i:i + 1, :] for i in range(6))

        # --- fused QKV projection over all tokens of all batches: one matmul ---
        qkv = jnp.dot(x, wqkv, preferred_element_type=jnp.float32) + bqkv   # (N, 3D)
        q = qkv[:, 0:D] * scale                  # scale folded into q once
        k = qkv[:, D:2 * D]
        v = qkv[:, 2 * D:3 * D]

        # --- attention: all (batch, head) problems in ONE batched contraction ---
        qs = jnp.stack([q[b * S:(b + 1) * S, h * hd:(h + 1) * hd]
                        for b in range(B) for h in range(H)], axis=0)       # (BH, S, hd)
        ks = jnp.stack([k[b * S:(b + 1) * S, h * hd:(h + 1) * hd]
                        for b in range(B) for h in range(H)], axis=0)
        vs = jnp.stack([v[b * S:(b + 1) * S, h * hd:(h + 1) * hd]
                        for b in range(B) for h in range(H)], axis=0)

        s = jnp.einsum('nqd,nkd->nqk', qs, ks,
                       preferred_element_type=jnp.float32)                  # (BH, S, S)
        s = s - jnp.max(s, axis=-1, keepdims=True)
        p = jnp.exp(s)
        p = p * pl.reciprocal(jnp.sum(p, axis=-1, keepdims=True), approx=True)
        ctx = jnp.einsum('nqk,nkd->nqd', p, vs,
                         preferred_element_type=jnp.float32)                # (BH, S, hd)

        # Reassemble heads along lanes, batches along rows -> (N, D).
        attn = jnp.concatenate(
            [jnp.concatenate([ctx[b * H + h] for h in range(H)], axis=-1)
             for b in range(B)], axis=0)
        attn = jnp.dot(attn, wo, preferred_element_type=jnp.float32) + bo

        # --- residual + LayerNorm 1 (post-norm) ---
        x1 = _layernorm(x + attn, g1, be1)

        # --- feed-forward: linear -> ReLU -> linear (whole slab at once) ---
        h_ff = jnp.dot(x1, w1, preferred_element_type=jnp.float32) + b1
        h_ff = jnp.maximum(h_ff, 0.0)
        ff = jnp.dot(h_ff, w2, preferred_element_type=jnp.float32) + b2

        # --- residual + LayerNorm 2 ---
        x = _layernorm(x1 + ff, g2, be2)

    for b in range(B):                           # sublane-aligned row-slab writes
        o_ref[b] = x[b * S:(b + 1) * S, :].astype(o_ref.dtype)


# ------------------------------ wrapper / params ------------------------------


def init_params(key, input_dim, hidden_dim, num_layers):
    """Deterministic synthetic parameters, packed per-category with a leading layer axis."""
    D, F, L = input_dim, hidden_dim, num_layers
    ks = jax.random.split(key, 4)
    s_attn = 1.0 / (D ** 0.5)
    s_ff1 = 1.0 / (D ** 0.5)
    s_ff2 = 1.0 / (F ** 0.5)

    wqkv = jax.random.normal(ks[0], (L, D, 3 * D), jnp.float32) * s_attn
    bqkv = jnp.zeros((L, 1, 3 * D), jnp.float32)
    wo = jax.random.normal(ks[1], (L, D, D), jnp.float32) * s_attn
    w1 = jax.random.normal(ks[2], (L, D, F), jnp.float32) * s_ff1
    b1 = jnp.zeros((L, 1, F), jnp.float32)
    w2 = jax.random.normal(ks[3], (L, F, D), jnp.float32) * s_ff2
    # Packed small (D,)-sized vectors: [bo, ln1_gamma, ln1_beta, b2, ln2_gamma, ln2_beta]
    dvec = jnp.stack(
        [jnp.zeros((L, D)), jnp.ones((L, D)), jnp.zeros((L, D)),
         jnp.zeros((L, D)), jnp.ones((L, D)), jnp.zeros((L, D))],
        axis=1,
    ).astype(jnp.float32)                                   # (L, 6, D)

    return (wqkv, bqkv, wo, dvec, w1, b1, w2)


def transformer_encoder(x, params, *, num_heads):
    """x: (S, B, D) as in PyTorch (batch_first=False). Returns (S, B, D)."""
    S, B, D = x.shape
    wqkv, bqkv, wo, dvec, w1, b1, w2 = params
    num_layers = wqkv.shape[0]

    xb = jnp.transpose(x, (1, 0, 2))            # (B, S, D); tiny, fused by XLA

    kernel = functools.partial(
        _encoder_stack_kernel, num_heads=num_heads, num_layers=num_layers)

    out = pl.pallas_call(
        kernel,
        out_shape=jax.ShapeDtypeStruct((B, S, D), jnp.float32),
        # no grid / no BlockSpecs: single invocation, whole arrays resident in VMEM
    )(xb, wqkv, bqkv, wo, dvec, w1, b1, w2)

    return jnp.transpose(out, (1, 0, 2))        # back to (S, B, D)


# ----------------------------------- main -------------------------------------


if __name__ == "__main__":
    # Small config consistent with the module: d_model=32, nhead=4,
    # dim_feedforward=64, num_layers=2; seq=8, batch=2.
    input_dim, hidden_dim, num_layers, num_heads = 32, 64, 2, 4
    S, B = 8, 2

    key = jax.random.PRNGKey(0)
    kx, kp = jax.random.split(key)
    x = jax.random.normal(kx, (S, B, input_dim), jnp.float32)   # (seq, batch, d_model)
    params = init_params(kp, input_dim, hidden_dim, num_layers)

    fwd = jax.jit(functools.partial(transformer_encoder, num_heads=num_heads))
    out = jax.block_until_ready(fwd(x, params))

    assert out.shape == (S, B, input_dim), out.shape
    assert bool(jnp.all(jnp.isfinite(out)))
    print("KERNEL_OK")
</pallas_src>

<mosaic_0001>
module attributes {stable_mosaic.version = 11 : i64} {
  func.func @_encoder_stack_kernel(%arg0: memref<2x8x32xf32, #tpu.memory_space<vmem>>, %arg1: memref<2x32x96xf32, #tpu.memory_space<vmem>>, %arg2: memref<2x1x96xf32, #tpu.memory_space<vmem>>, %arg3: memref<2x32x32xf32, #tpu.memory_space<vmem>>, %arg4: memref<2x6x32xf32, #tpu.memory_space<vmem>>, %arg5: memref<2x32x64xf32, #tpu.memory_space<vmem>>, %arg6: memref<2x1x64xf32, #tpu.memory_space<vmem>>, %arg7: memref<2x64x32xf32, #tpu.memory_space<vmem>>, %arg8: memref<2x8x32xf32, #tpu.memory_space<vmem>>) attributes {dimension_semantics = [], scalar_prefetch = 0 : i64, scratch_operands = 0 : i64, tpu.core_type = #tpu.core_type<tc>} {
    %c0 = arith.constant 0 : index
    %c0_0 = arith.constant 0 : index
    %c0_1 = arith.constant 0 : index
    %0 = vector.load %arg0[%c0, %c0_0, %c0_1] : memref<2x8x32xf32, #tpu.memory_space<vmem>>, vector<1x8x32xf32>
    %1 = vector.shape_cast %0 : vector<1x8x32xf32> to vector<8x32xf32>
    %c1 = arith.constant 1 : index
    %c0_2 = arith.constant 0 : index
    %c0_3 = arith.constant 0 : index
    %2 = vector.load %arg0[%c1, %c0_2, %c0_3] : memref<2x8x32xf32, #tpu.memory_space<vmem>>, vector<1x8x32xf32>
    %3 = vector.shape_cast %2 : vector<1x8x32xf32> to vector<8x32xf32>
    %4 = tpu.concatenate %1, %3 in 0 : vector<8x32xf32>, vector<8x32xf32> -> vector<16x32xf32>
    %c0_4 = arith.constant 0 : index
    %c0_5 = arith.constant 0 : index
    %c0_6 = arith.constant 0 : index
    %5 = vector.load %arg1[%c0_4, %c0_5, %c0_6] : memref<2x32x96xf32, #tpu.memory_space<vmem>>, vector<1x32x96xf32>
    %6 = vector.shape_cast %5 : vector<1x32x96xf32> to vector<32x96xf32>
    %c0_7 = arith.constant 0 : index
    %c0_8 = arith.constant 0 : index
    %c0_9 = arith.constant 0 : index
    %7 = vector.load %arg2[%c0_7, %c0_8, %c0_9] : memref<2x1x96xf32, #tpu.memory_space<vmem>>, vector<1x1x96xf32>
    %8 = vector.shape_cast %7 : vector<1x1x96xf32> to vector<1x96xf32>
    %c0_10 = arith.constant 0 : index
    %c0_11 = arith.constant 0 : index
    %c0_12 = arith.constant 0 : index
    %9 = vector.load %arg3[%c0_10, %c0_11, %c0_12] : memref<2x32x32xf32, #tpu.memory_space<vmem>>, vector<1x32x32xf32>
    %10 = vector.shape_cast %9 : vector<1x32x32xf32> to vector<32x32xf32>
    %c0_13 = arith.constant 0 : index
    %c0_14 = arith.constant 0 : index
    %c0_15 = arith.constant 0 : index
    %11 = vector.load %arg5[%c0_13, %c0_14, %c0_15] : memref<2x32x64xf32, #tpu.memory_space<vmem>>, vector<1x32x64xf32>
    %12 = vector.shape_cast %11 : vector<1x32x64xf32> to vector<32x64xf32>
    %c0_16 = arith.constant 0 : index
    %c0_17 = arith.constant 0 : index
    %c0_18 = arith.constant 0 : index
    %13 = vector.load %arg6[%c0_16, %c0_17, %c0_18] : memref<2x1x64xf32, #tpu.memory_space<vmem>>, vector<1x1x64xf32>
    %14 = vector.shape_cast %13 : vector<1x1x64xf32> to vector<1x64xf32>
    %c0_19 = arith.constant 0 : index
    %c0_20 = arith.constant 0 : index
    %c0_21 = arith.constant 0 : index
    %15 = vector.load %arg7[%c0_19, %c0_20, %c0_21] : memref<2x64x32xf32, #tpu.memory_space<vmem>>, vector<1x64x32xf32>
    %16 = vector.shape_cast %15 : vector<1x64x32xf32> to vector<64x32xf32>
    %c0_22 = arith.constant 0 : index
    %c0_23 = arith.constant 0 : index
    %c0_24 = arith.constant 0 : index
    %17 = vector.load %arg4[%c0_22, %c0_23, %c0_24] : memref<2x6x32xf32, #tpu.memory_space<vmem>>, vector<1x6x32xf32>
    %18 = vector.shape_cast %17 : vector<1x6x32xf32> to vector<6x32xf32>
    %19 = vector.extract_strided_slice %18 {offsets = [0, 0], sizes = [1, 32], strides = [1, 1]} : vector<6x32xf32> to vector<1x32xf32>
    %20 = vector.extract_strided_slice %18 {offsets = [1, 0], sizes = [1, 32], strides = [1, 1]} : vector<6x32xf32> to vector<1x32xf32>
    %21 = vector.extract_strided_slice %18 {offsets = [2, 0], sizes = [1, 32], strides = [1, 1]} : vector<6x32xf32> to vector<1x32xf32>
    %22 = vector.extract_strided_slice %18 {offsets = [3, 0], sizes = [1, 32], strides = [1, 1]} : vector<6x32xf32> to vector<1x32xf32>
    %23 = vector.extract_strided_slice %18 {offsets = [4, 0], sizes = [1, 32], strides = [1, 1]} : vector<6x32xf32> to vector<1x32xf32>
    %24 = vector.extract_strided_slice %18 {offsets = [5, 0], sizes = [1, 32], strides = [1, 1]} : vector<6x32xf32> to vector<1x32xf32>
    %cst = arith.constant dense<0.000000e+00> : vector<16x96xf32>
    %25 = tpu.matmul %4, %6, %cst {dimension_numbers = #tpu.dot_dimension_numbers<[1], [0], [0], [1], [0, 0, 1, 1], [], []>} : vector<16x32xf32>, vector<32x96xf32>, vector<16x96xf32> -> vector<16x96xf32>
    %26 = vector.broadcast %8 : vector<1x96xf32> to vector<16x96xf32>
    %27 = arith.addf %25, %26 : vector<16x96xf32>
    %28 = vector.extract_strided_slice %27 {offsets = [0, 0], sizes = [16, 32], strides = [1, 1]} : vector<16x96xf32> to vector<16x32xf32>
    %cst_25 = arith.constant 0.353553385 : f32
    %29 = vector.broadcast %cst_25 : f32 to vector<16x32xf32>
    %30 = arith.mulf %28, %29 : vector<16x32xf32>
    %31 = vector.extract_strided_slice %27 {offsets = [0, 32], sizes = [16, 32], strides = [1, 1]} : vector<16x96xf32> to vector<16x32xf32>
    %32 = vector.extract_strided_slice %27 {offsets = [0, 64], sizes = [16, 32], strides = [1, 1]} : vector<16x96xf32> to vector<16x32xf32>
    %33 = vector.extract_strided_slice %30 {offsets = [0, 0], sizes = [8, 8], strides = [1, 1]} : vector<16x32xf32> to vector<8x8xf32>
    %34 = vector.extract_strided_slice %30 {offsets = [0, 8], sizes = [8, 8], strides = [1, 1]} : vector<16x32xf32> to vector<8x8xf32>
    %35 = vector.extract_strided_slice %30 {offsets = [0, 16], sizes = [8, 8], strides = [1, 1]} : vector<16x32xf32> to vector<8x8xf32>
    %36 = vector.extract_strided_slice %30 {offsets = [0, 24], sizes = [8, 8], strides = [1, 1]} : vector<16x32xf32> to vector<8x8xf32>
    %37 = vector.extract_strided_slice %30 {offsets = [8, 0], sizes = [8, 8], strides = [1, 1]} : vector<16x32xf32> to vector<8x8xf32>
    %38 = vector.extract_strided_slice %30 {offsets = [8, 8], sizes = [8, 8], strides = [1, 1]} : vector<16x32xf32> to vector<8x8xf32>
    %39 = vector.extract_strided_slice %30 {offsets = [8, 16], sizes = [8, 8], strides = [1, 1]} : vector<16x32xf32> to vector<8x8xf32>
    %40 = vector.extract_strided_slice %30 {offsets = [8, 24], sizes = [8, 8], strides = [1, 1]} : vector<16x32xf32> to vector<8x8xf32>
    %41 = vector.shape_cast %33 : vector<8x8xf32> to vector<1x8x8xf32>
    %42 = vector.shape_cast %34 : vector<8x8xf32> to vector<1x8x8xf32>
    %43 = vector.shape_cast %35 : vector<8x8xf32> to vector<1x8x8xf32>
    %44 = vector.shape_cast %36 : vector<8x8xf32> to vector<1x8x8xf32>
    %45 = vector.shape_cast %37 : vector<8x8xf32> to vector<1x8x8xf32>
    %46 = vector.shape_cast %38 : vector<8x8xf32> to vector<1x8x8xf32>
    %47 = vector.shape_cast %39 : vector<8x8xf32> to vector<1x8x8xf32>
    %48 = vector.shape_cast %40 : vector<8x8xf32> to vector<1x8x8xf32>
    %49 = tpu.concatenate %41, %42, %43, %44, %45, %46, %47, %48 in 0 : vector<1x8x8xf32>, vector<1x8x8xf32>, vector<1x8x8xf32>, vector<1x8x8xf32>, vector<1x8x8xf32>, vector<1x8x8xf32>, vector<1x8x8xf32>, vector<1x8x8xf32> -> vector<8x8x8xf32>
    %50 = vector.extract_strided_slice %31 {offsets = [0, 0], sizes = [8, 8], strides = [1, 1]} : vector<16x32xf32> to vector<8x8xf32>
    %51 = vector.extract_strided_slice %31 {offsets = [0, 8], sizes = [8, 8], strides = [1, 1]} : vector<16x32xf32> to vector<8x8xf32>
    %52 = vector.extract_strided_slice %31 {offsets = [0, 16], sizes = [8, 8], strides = [1, 1]} : vector<16x32xf32> to vector<8x8xf32>
    %53 = vector.extract_strided_slice %31 {offsets = [0, 24], sizes = [8, 8], strides = [1, 1]} : vector<16x32xf32> to vector<8x8xf32>
    %54 = vector.extract_strided_slice %31 {offsets = [8, 0], sizes = [8, 8], strides = [1, 1]} : vector<16x32xf32> to vector<8x8xf32>
    %55 = vector.extract_strided_slice %31 {offsets = [8, 8], sizes = [8, 8], strides = [1, 1]} : vector<16x32xf32> to vector<8x8xf32>
    %56 = vector.extract_strided_slice %31 {offsets = [8, 16], sizes = [8, 8], strides = [1, 1]} : vector<16x32xf32> to vector<8x8xf32>
    %57 = vector.extract_strided_slice %31 {offsets = [8, 24], sizes = [8, 8], strides = [1, 1]} : vector<16x32xf32> to vector<8x8xf32>
    %58 = vector.shape_cast %50 : vector<8x8xf32> to vector<1x8x8xf32>
    %59 = vector.shape_cast %51 : vector<8x8xf32> to vector<1x8x8xf32>
    %60 = vector.shape_cast %52 : vector<8x8xf32> to vector<1x8x8xf32>
    %61 = vector.shape_cast %53 : vector<8x8xf32> to vector<1x8x8xf32>
    %62 = vector.shape_cast %54 : vector<8x8xf32> to vector<1x8x8xf32>
    %63 = vector.shape_cast %55 : vector<8x8xf32> to vector<1x8x8xf32>
    %64 = vector.shape_cast %56 : vector<8x8xf32> to vector<1x8x8xf32>
    %65 = vector.shape_cast %57 : vector<8x8xf32> to vector<1x8x8xf32>
    %66 = tpu.concatenate %58, %59, %60, %61, %62, %63, %64, %65 in 0 : vector<1x8x8xf32>, vector<1x8x8xf32>, vector<1x8x8xf32>, vector<1x8x8xf32>, vector<1x8x8xf32>, vector<1x8x8xf32>, vector<1x8x8xf32>, vector<1x8x8xf32> -> vector<8x8x8xf32>
    %67 = vector.extract_strided_slice %32 {offsets = [0, 0], sizes = [8, 8], strides = [1, 1]} : vector<16x32xf32> to vector<8x8xf32>
    %68 = vector.extract_strided_slice %32 {offsets = [0, 8], sizes = [8, 8], strides = [1, 1]} : vector<16x32xf32> to vector<8x8xf32>
    %69 = vector.extract_strided_slice %32 {offsets = [0, 16], sizes = [8, 8], strides = [1, 1]} : vector<16x32xf32> to vector<8x8xf32>
    %70 = vector.extract_strided_slice %32 {offsets = [0, 24], sizes = [8, 8], strides = [1, 1]} : vector<16x32xf32> to vector<8x8xf32>
    %71 = vector.extract_strided_slice %32 {offsets = [8, 0], sizes = [8, 8], strides = [1, 1]} : vector<16x32xf32> to vector<8x8xf32>
    %72 = vector.extract_strided_slice %32 {offsets = [8, 8], sizes = [8, 8], strides = [1, 1]} : vector<16x32xf32> to vector<8x8xf32>
    %73 = vector.extract_strided_slice %32 {offsets = [8, 16], sizes = [8, 8], strides = [1, 1]} : vector<16x32xf32> to vector<8x8xf32>
    %74 = vector.extract_strided_slice %32 {offsets = [8, 24], sizes = [8, 8], strides = [1, 1]} : vector<16x32xf32> to vector<8x8xf32>
    %75 = vector.shape_cast %67 : vector<8x8xf32> to vector<1x8x8xf32>
    %76 = vector.shape_cast %68 : vector<8x8xf32> to vector<1x8x8xf32>
    %77 = vector.shape_cast %69 : vector<8x8xf32> to vector<1x8x8xf32>
    %78 = vector.shape_cast %70 : vector<8x8xf32> to vector<1x8x8xf32>
    %79 = vector.shape_cast %71 : vector<8x8xf32> to vector<1x8x8xf32>
    %80 = vector.shape_cast %72 : vector<8x8xf32> to vector<1x8x8xf32>
    %81 = vector.shape_cast %73 : vector<8x8xf32> to vector<1x8x8xf32>
    %82 = vector.shape_cast %74 : vector<8x8xf32> to vector<1x8x8xf32>
    %83 = tpu.concatenate %75, %76, %77, %78, %79, %80, %81, %82 in 0 : vector<1x8x8xf32>, vector<1x8x8xf32>, vector<1x8x8xf32>, vector<1x8x8xf32>, vector<1x8x8xf32>, vector<1x8x8xf32>, vector<1x8x8xf32>, vector<1x8x8xf32> -> vector<8x8x8xf32>
    "tpu.trace_start"() <{level = 10 : i32, message = "nqd,nkd->nqk"}> : () -> ()
    %cst_26 = arith.constant dense<0.000000e+00> : vector<8x8x8xf32>
    %84 = tpu.matmul %49, %66, %cst_26 {dimension_numbers = #tpu.dot_dimension_numbers<[2], [2], [1], [1], [0, 0, 0, 1, 1, 1], [0], [0]>} : vector<8x8x8xf32>, vector<8x8x8xf32>, vector<8x8x8xf32> -> vector<8x8x8xf32>
    "tpu.trace_stop"() : () -> ()
    %cst_27 = arith.constant dense<0xFF800000> : vector<8x8xf32>
    %85 = vector.multi_reduction <maximumf>, %84, %cst_27 [2] : vector<8x8x8xf32> to vector<8x8xf32>
    %86 = vector.shape_cast %85 : vector<8x8xf32> to vector<8x8x1xf32>
    %87 = vector.broadcast %86 : vector<8x8x1xf32> to vector<8x8x8xf32>
    %88 = arith.subf %84, %87 : vector<8x8x8xf32>
    %89 = math.exp %88 : vector<8x8x8xf32>
    %cst_28 = arith.constant dense<0.000000e+00> : vector<8x8xf32>
    %90 = vector.multi_reduction <add>, %89, %cst_28 [2] : vector<8x8x8xf32> to vector<8x8xf32>
    %91 = vector.shape_cast %90 : vector<8x8xf32> to vector<8x8x1xf32>
    %92 = tpu.reciprocal %91 {approx = true} : vector<8x8x1xf32> -> vector<8x8x1xf32>
    %93 = vector.broadcast %92 : vector<8x8x1xf32> to vector<8x8x8xf32>
    %94 = arith.mulf %89, %93 : vector<8x8x8xf32>
    "tpu.trace_start"() <{level = 10 : i32, message = "nqk,nkd->nqd"}> : () -> ()
    %cst_29 = arith.constant dense<0.000000e+00> : vector<8x8x8xf32>
    %95 = tpu.matmul %94, %83, %cst_29 {dimension_numbers = #tpu.dot_dimension_numbers<[2], [1], [1], [2], [0, 0, 0, 1, 1, 2], [0], [0]>} : vector<8x8x8xf32>, vector<8x8x8xf32>, vector<8x8x8xf32> -> vector<8x8x8xf32>
    "tpu.trace_stop"() : () -> ()
    %96 = vector.extract_strided_slice %95 {offsets = [0, 0, 0], sizes = [1, 8, 8], strides = [1, 1, 1]} : vector<8x8x8xf32> to vector<1x8x8xf32>
    %97 = vector.shape_cast %96 : vector<1x8x8xf32> to vector<8x8xf32>
    %98 = vector.extract_strided_slice %95 {offsets = [1, 0, 0], sizes = [1, 8, 8], strides = [1, 1, 1]} : vector<8x8x8xf32> to vector<1x8x8xf32>
    %99 = vector.shape_cast %98 : vector<1x8x8xf32> to vector<8x8xf32>
    %100 = vector.extract_strided_slice %95 {offsets = [2, 0, 0], sizes = [1, 8, 8], strides = [1, 1, 1]} : vector<8x8x8xf32> to vector<1x8x8xf32>
    %101 = vector.shape_cast %100 : vector<1x8x8xf32> to vector<8x8xf32>
    %102 = vector.extract_strided_slice %95 {offsets = [3, 0, 0], sizes = [1, 8, 8], strides = [1, 1, 1]} : vector<8x8x8xf32> to vector<1x8x8xf32>
    %103 = vector.shape_cast %102 : vector<1x8x8xf32> to vector<8x8xf32>
    %104 = tpu.concatenate %97, %99, %101, %103 in 1 : vector<8x8xf32>, vector<8x8xf32>, vector<8x8xf32>, vector<8x8xf32> -> vector<8x32xf32>
    %105 = vector.extract_strided_slice %95 {offsets = [4, 0, 0], sizes = [1, 8, 8], strides = [1, 1, 1]} : vector<8x8x8xf32> to vector<1x8x8xf32>
    %106 = vector.shape_cast %105 : vector<1x8x8xf32> to vector<8x8xf32>
    %107 = vector.extract_strided_slice %95 {offsets = [5, 0, 0], sizes = [1, 8, 8], strides = [1, 1, 1]} : vector<8x8x8xf32> to vector<1x8x8xf32>
    %108 = vector.shape_cast %107 : vector<1x8x8xf32> to vector<8x8xf32>
    %109 = vector.extract_strided_slice %95 {offsets = [6, 0, 0], sizes = [1, 8, 8], strides = [1, 1, 1]} : vector<8x8x8xf32> to vector<1x8x8xf32>
    %110 = vector.shape_cast %109 : vector<1x8x8xf32> to vector<8x8xf32>
    %111 = vector.extract_strided_slice %95 {offsets = [7, 0, 0], sizes = [1, 8, 8], strides = [1, 1, 1]} : vector<8x8x8xf32> to vector<1x8x8xf32>
    %112 = vector.shape_cast %111 : vector<1x8x8xf32> to vector<8x8xf32>
    %113 = tpu.concatenate %106, %108, %110, %112 in 1 : vector<8x8xf32>, vector<8x8xf32>, vector<8x8xf32>, vector<8x8xf32> -> vector<8x32xf32>
    %114 = tpu.concatenate %104, %113 in 0 : vector<8x32xf32>, vector<8x32xf32> -> vector<16x32xf32>
    %cst_30 = arith.constant dense<0.000000e+00> : vector<16x32xf32>
    %115 = tpu.matmul %114, %10, %cst_30 {dimension_numbers = #tpu.dot_dimension_numbers<[1], [0], [0], [1], [0, 0, 1, 1], [], []>} : vector<16x32xf32>, vector<32x32xf32>, vector<16x32xf32> -> vector<16x32xf32>
    %116 = vector.broadcast %19 : vector<1x32xf32> to vector<16x32xf32>
    %117 = arith.addf %115, %116 : vector<16x32xf32>
    %118 = arith.addf %4, %117 : vector<16x32xf32>
    %cst_31 = arith.constant dense<0.000000e+00> : vector<16xf32>
    %119 = vector.multi_reduction <add>, %118, %cst_31 [1] : vector<16x32xf32> to vector<16xf32>
    %120 = vector.shape_cast %119 : vector<16xf32> to vector<16x1xf32>
    %cst_32 = arith.constant 3.200000e+01 : f32
    %121 = vector.broadcast %cst_32 : f32 to vector<16x1xf32>
    %122 = arith.divf %120, %121 : vector<16x1xf32>
    %123 = vector.broadcast %122 : vector<16x1xf32> to vector<16x32xf32>
    %124 = arith.subf %118, %123 : vector<16x32xf32>
    %125 = arith.mulf %124, %124 : vector<16x32xf32>
    %cst_33 = arith.constant dense<0.000000e+00> : vector<16xf32>
    %126 = vector.multi_reduction <add>, %125, %cst_33 [1] : vector<16x32xf32> to vector<16xf32>
    %127 = vector.shape_cast %126 : vector<16xf32> to vector<16x1xf32>
    %cst_34 = arith.constant 3.200000e+01 : f32
    %128 = vector.broadcast %cst_34 : f32 to vector<16x1xf32>
    %129 = arith.divf %127, %128 : vector<16x1xf32>
    %130 = vector.broadcast %122 : vector<16x1xf32> to vector<16x32xf32>
    %131 = arith.subf %118, %130 : vector<16x32xf32>
    %cst_35 = arith.constant 9.99999974E-6 : f32
    %132 = vector.broadcast %cst_35 : f32 to vector<16x1xf32>
    %133 = arith.addf %129, %132 : vector<16x1xf32>
    %134 = math.rsqrt %133 : vector<16x1xf32>
    %135 = vector.broadcast %134 : vector<16x1xf32> to vector<16x32xf32>
    %136 = arith.mulf %131, %135 : vector<16x32xf32>
    %137 = vector.broadcast %20 : vector<1x32xf32> to vector<16x32xf32>
    %138 = arith.mulf %136, %137 : vector<16x32xf32>
    %139 = vector.broadcast %21 : vector<1x32xf32> to vector<16x32xf32>
    %140 = arith.addf %138, %139 : vector<16x32xf32>
    %cst_36 = arith.constant dense<0.000000e+00> : vector<16x64xf32>
    %141 = tpu.matmul %140, %12, %cst_36 {dimension_numbers = #tpu.dot_dimension_numbers<[1], [0], [0], [1], [0, 0, 1, 1], [], []>} : vector<16x32xf32>, vector<32x64xf32>, vector<16x64xf32> -> vector<16x64xf32>
    %142 = vector.broadcast %14 : vector<1x64xf32> to vector<16x64xf32>
    %143 = arith.addf %141, %142 : vector<16x64xf32>
    %cst_37 = arith.constant 0.000000e+00 : f32
    %144 = vector.broadcast %cst_37 : f32 to vector<16x64xf32>
    %145 = arith.maximumf %143, %144 : vector<16x64xf32>
    %cst_38 = arith.constant dense<0.000000e+00> : vector<16x32xf32>
    %146 = tpu.matmul %145, %16, %cst_38 {dimension_numbers = #tpu.dot_dimension_numbers<[1], [0], [0], [1], [0, 0, 1, 1], [], []>} : vector<16x64xf32>, vector<64x32xf32>, vector<16x32xf32> -> vector<16x32xf32>
    %147 = vector.broadcast %22 : vector<1x32xf32> to vector<16x32xf32>
    %148 = arith.addf %146, %147 : vector<16x32xf32>
    %149 = arith.addf %140, %148 : vector<16x32xf32>
    %cst_39 = arith.constant dense<0.000000e+00> : vector<16xf32>
    %150 = vector.multi_reduction <add>, %149, %cst_39 [1] : vector<16x32xf32> to vector<16xf32>
    %151 = vector.shape_cast %150 : vector<16xf32> to vector<16x1xf32>
    %cst_40 = arith.constant 3.200000e+01 : f32
    %152 = vector.broadcast %cst_40 : f32 to vector<16x1xf32>
    %153 = arith.divf %151, %152 : vector<16x1xf32>
    %154 = vector.broadcast %153 : vector<16x1xf32> to vector<16x32xf32>
    %155 = arith.subf %149, %154 : vector<16x32xf32>
    %156 = arith.mulf %155, %155 : vector<16x32xf32>
    %cst_41 = arith.constant dense<0.000000e+00> : vector<16xf32>
    %157 = vector.multi_reduction <add>, %156, %cst_41 [1] : vector<16x32xf32> to vector<16xf32>
    %158 = vector.shape_cast %157 : vector<16xf32> to vector<16x1xf32>
    %cst_42 = arith.constant 3.200000e+01 : f32
    %159 = vector.broadcast %cst_42 : f32 to vector<16x1xf32>
    %160 = arith.divf %158, %159 : vector<16x1xf32>
    %161 = vector.broadcast %153 : vector<16x1xf32> to vector<16x32xf32>
    %162 = arith.subf %149, %161 : vector<16x32xf32>
    %cst_43 = arith.constant 9.99999974E-6 : f32
    %163 = vector.broadcast %cst_43 : f32 to vector<16x1xf32>
    %164 = arith.addf %160, %163 : vector<16x1xf32>
    %165 = math.rsqrt %164 : vector<16x1xf32>
    %166 = vector.broadcast %165 : vector<16x1xf32> to vector<16x32xf32>
    %167 = arith.mulf %162, %166 : vector<16x32xf32>
    %168 = vector.broadcast %23 : vector<1x32xf32> to vector<16x32xf32>
    %169 = arith.mulf %167, %168 : vector<16x32xf32>
    %170 = vector.broadcast %24 : vector<1x32xf32> to vector<16x32xf32>
    %171 = arith.addf %169, %170 : vector<16x32xf32>
    %c1_44 = arith.constant 1 : index
    %c0_45 = arith.constant 0 : index
    %c0_46 = arith.constant 0 : index
    %172 = vector.load %arg1[%c1_44, %c0_45, %c0_46] : memref<2x32x96xf32, #tpu.memory_space<vmem>>, vector<1x32x96xf32>
    %173 = vector.shape_cast %172 : vector<1x32x96xf32> to vector<32x96xf32>
    %c1_47 = arith.constant 1 : index
    %c0_48 = arith.constant 0 : index
    %c0_49 = arith.constant 0 : index
    %174 = vector.load %arg2[%c1_47, %c0_48, %c0_49] : memref<2x1x96xf32, #tpu.memory_space<vmem>>, vector<1x1x96xf32>
    %175 = vector.shape_cast %174 : vector<1x1x96xf32> to vector<1x96xf32>
    %c1_50 = arith.constant 1 : index
    %c0_51 = arith.constant 0 : index
    %c0_52 = arith.constant 0 : index
    %176 = vector.load %arg3[%c1_50, %c0_51, %c0_52] : memref<2x32x32xf32, #tpu.memory_space<vmem>>, vector<1x32x32xf32>
    %177 = vector.shape_cast %176 : vector<1x32x32xf32> to vector<32x32xf32>
    %c1_53 = arith.constant 1 : index
    %c0_54 = arith.constant 0 : index
    %c0_55 = arith.constant 0 : index
    %178 = vector.load %arg5[%c1_53, %c0_54, %c0_55] : memref<2x32x64xf32, #tpu.memory_space<vmem>>, vector<1x32x64xf32>
    %179 = vector.shape_cast %178 : vector<1x32x64xf32> to vector<32x64xf32>
    %c1_56 = arith.constant 1 : index
    %c0_57 = arith.constant 0 : index
    %c0_58 = arith.constant 0 : index
    %180 = vector.load %arg6[%c1_56, %c0_57, %c0_58] : memref<2x1x64xf32, #tpu.memory_space<vmem>>, vector<1x1x64xf32>
    %181 = vector.shape_cast %180 : vector<1x1x64xf32> to vector<1x64xf32>
    %c1_59 = arith.constant 1 : index
    %c0_60 = arith.constant 0 : index
    %c0_61 = arith.constant 0 : index
    %182 = vector.load %arg7[%c1_59, %c0_60, %c0_61] : memref<2x64x32xf32, #tpu.memory_space<vmem>>, vector<1x64x32xf32>
    %183 = vector.shape_cast %182 : vector<1x64x32xf32> to vector<64x32xf32>
    %c1_62 = arith.constant 1 : index
    %c0_63 = arith.constant 0 : index
    %c0_64 = arith.constant 0 : index
    %184 = vector.load %arg4[%c1_62, %c0_63, %c0_64] : memref<2x6x32xf32, #tpu.memory_space<vmem>>, vector<1x6x32xf32>
    %185 = vector.shape_cast %184 : vector<1x6x32xf32> to vector<6x32xf32>
    %186 = vector.extract_strided_slice %185 {offsets = [0, 0], sizes = [1, 32], strides = [1, 1]} : vector<6x32xf32> to vector<1x32xf32>
    %187 = vector.extract_strided_slice %185 {offsets = [1, 0], sizes = [1, 32], strides = [1, 1]} : vector<6x32xf32> to vector<1x32xf32>
    %188 = vector.extract_strided_slice %185 {offsets = [2, 0], sizes = [1, 32], strides = [1, 1]} : vector<6x32xf32> to vector<1x32xf32>
    %189 = vector.extract_strided_slice %185 {offsets = [3, 0], sizes = [1, 32], strides = [1, 1]} : vector<6x32xf32> to vector<1x32xf32>
    %190 = vector.extract_strided_slice %185 {offsets = [4, 0], sizes = [1, 32], strides = [1, 1]} : vector<6x32xf32> to vector<1x32xf32>
    %191 = vector.extract_strided_slice %185 {offsets = [5, 0], sizes = [1, 32], strides = [1, 1]} : vector<6x32xf32> to vector<1x32xf32>
    %cst_65 = arith.constant dense<0.000000e+00> : vector<16x96xf32>
    %192 = tpu.matmul %171, %173, %cst_65 {dimension_numbers = #tpu.dot_dimension_numbers<[1], [0], [0], [1], [0, 0, 1, 1], [], []>} : vector<16x32xf32>, vector<32x96xf32>, vector<16x96xf32> -> vector<16x96xf32>
    %193 = vector.broadcast %175 : vector<1x96xf32> to vector<16x96xf32>
    %194 = arith.addf %192, %193 : vector<16x96xf32>
    %195 = vector.extract_strided_slice %194 {offsets = [0, 0], sizes = [16, 32], strides = [1, 1]} : vector<16x96xf32> to vector<16x32xf32>
    %cst_66 = arith.constant 0.353553385 : f32
    %196 = vector.broadcast %cst_66 : f32 to vector<16x32xf32>
    %197 = arith.mulf %195, %196 : vector<16x32xf32>
    %198 = vector.extract_strided_slice %194 {offsets = [0, 32], sizes = [16, 32], strides = [1, 1]} : vector<16x96xf32> to vector<16x32xf32>
    %199 = vector.extract_strided_slice %194 {offsets = [0, 64], sizes = [16, 32], strides = [1, 1]} : vector<16x96xf32> to vector<16x32xf32>
    %200 = vector.extract_strided_slice %197 {offsets = [0, 0], sizes = [8, 8], strides = [1, 1]} : vector<16x32xf32> to vector<8x8xf32>
    %201 = vector.extract_strided_slice %197 {offsets = [0, 8], sizes = [8, 8], strides = [1, 1]} : vector<16x32xf32> to vector<8x8xf32>
    %202 = vector.extract_strided_slice %197 {offsets = [0, 16], sizes = [8, 8], strides = [1, 1]} : vector<16x32xf32> to vector<8x8xf32>
    %203 = vector.extract_strided_slice %197 {offsets = [0, 24], sizes = [8, 8], strides = [1, 1]} : vector<16x32xf32> to vector<8x8xf32>
    %204 = vector.extract_strided_slice %197 {offsets = [8, 0], sizes = [8, 8], strides = [1, 1]} : vector<16x32xf32> to vector<8x8xf32>
    %205 = vector.extract_strided_slice %197 {offsets = [8, 8], sizes = [8, 8], strides = [1, 1]} : vector<16x32xf32> to vector<8x8xf32>
    %206 = vector.extract_strided_slice %197 {offsets = [8, 16], sizes = [8, 8], strides = [1, 1]} : vector<16x32xf32> to vector<8x8xf32>
    %207 = vector.extract_strided_slice %197 {offsets = [8, 24], sizes = [8, 8], strides = [1, 1]} : vector<16x32xf32> to vector<8x8xf32>
    %208 = vector.shape_cast %200 : vector<8x8xf32> to vector<1x8x8xf32>
    %209 = vector.shape_cast %201 : vector<8x8xf32> to vector<1x8x8xf32>
    %210 = vector.shape_cast %202 : vector<8x8xf32> to vector<1x8x8xf32>
    %211 = vector.shape_cast %203 : vector<8x8xf32> to vector<1x8x8xf32>
    %212 = vector.shape_cast %204 : vector<8x8xf32> to vector<1x8x8xf32>
    %213 = vector.shape_cast %205 : vector<8x8xf32> to vector<1x8x8xf32>
    %214 = vector.shape_cast %206 : vector<8x8xf32> to vector<1x8x8xf32>
    %215 = vector.shape_cast %207 : vector<8x8xf32> to vector<1x8x8xf32>
    %216 = tpu.concatenate %208, %209, %210, %211, %212, %213, %214, %215 in 0 : vector<1x8x8xf32>, vector<1x8x8xf32>, vector<1x8x8xf32>, vector<1x8x8xf32>, vector<1x8x8xf32>, vector<1x8x8xf32>, vector<1x8x8xf32>, vector<1x8x8xf32> -> vector<8x8x8xf32>
    %217 = vector.extract_strided_slice %198 {offsets = [0, 0], sizes = [8, 8], strides = [1, 1]} : vector<16x32xf32> to vector<8x8xf32>
    %218 = vector.extract_strided_slice %198 {offsets = [0, 8], sizes = [8, 8], strides = [1, 1]} : vector<16x32xf32> to vector<8x8xf32>
    %219 = vector.extract_strided_slice %198 {offsets = [0, 16], sizes = [8, 8], strides = [1, 1]} : vector<16x32xf32> to vector<8x8xf32>
    %220 = vector.extract_strided_slice %198 {offsets = [0, 24], sizes = [8, 8], strides = [1, 1]} : vector<16x32xf32> to vector<8x8xf32>
    %221 = vector.extract_strided_slice %198 {offsets = [8, 0], sizes = [8, 8], strides = [1, 1]} : vector<16x32xf32> to vector<8x8xf32>
    %222 = vector.extract_strided_slice %198 {offsets = [8, 8], sizes = [8, 8], strides = [1, 1]} : vector<16x32xf32> to vector<8x8xf32>
    %223 = vector.extract_strided_slice %198 {offsets = [8, 16], sizes = [8, 8], strides = [1, 1]} : vector<16x32xf32> to vector<8x8xf32>
    %224 = vector.extract_strided_slice %198 {offsets = [8, 24], sizes = [8, 8], strides = [1, 1]} : vector<16x32xf32> to vector<8x8xf32>
    %225 = vector.shape_cast %217 : vector<8x8xf32> to vector<1x8x8xf32>
    %226 = vector.shape_cast %218 : vector<8x8xf32> to vector<1x8x8xf32>
    %227 = vector.shape_cast %219 : vector<8x8xf32> to vector<1x8x8xf32>
    %228 = vector.shape_cast %220 : vector<8x8xf32> to vector<1x8x8xf32>
    %229 = vector.shape_cast %221 : vector<8x8xf32> to vector<1x8x8xf32>
    %230 = vector.shape_cast %222 : vector<8x8xf32> to vector<1x8x8xf32>
    %231 = vector.shape_cast %223 : vector<8x8xf32> to vector<1x8x8xf32>
    %232 = vector.shape_cast %224 : vector<8x8xf32> to vector<1x8x8xf32>
    %233 = tpu.concatenate %225, %226, %227, %228, %229, %230, %231, %232 in 0 : vector<1x8x8xf32>, vector<1x8x8xf32>, vector<1x8x8xf32>, vector<1x8x8xf32>, vector<1x8x8xf32>, vector<1x8x8xf32>, vector<1x8x8xf32>, vector<1x8x8xf32> -> vector<8x8x8xf32>
    %234 = vector.extract_strided_slice %199 {offsets = [0, 0], sizes = [8, 8], strides = [1, 1]} : vector<16x32xf32> to vector<8x8xf32>
    %235 = vector.extract_strided_slice %199 {offsets = [0, 8], sizes = [8, 8], strides = [1, 1]} : vector<16x32xf32> to vector<8x8xf32>
    %236 = vector.extract_strided_slice %199 {offsets = [0, 16], sizes = [8, 8], strides = [1, 1]} : vector<16x32xf32> to vector<8x8xf32>
    %237 = vector.extract_strided_slice %199 {offsets = [0, 24], sizes = [8, 8], strides = [1, 1]} : vector<16x32xf32> to vector<8x8xf32>
    %238 = vector.extract_strided_slice %199 {offsets = [8, 0], sizes = [8, 8], strides = [1, 1]} : vector<16x32xf32> to vector<8x8xf32>
    %239 = vector.extract_strided_slice %199 {offsets = [8, 8], sizes = [8, 8], strides = [1, 1]} : vector<16x32xf32> to vector<8x8xf32>
    %240 = vector.extract_strided_slice %199 {offsets = [8, 16], sizes = [8, 8], strides = [1, 1]} : vector<16x32xf32> to vector<8x8xf32>
    %241 = vector.extract_strided_slice %199 {offsets = [8, 24], sizes = [8, 8], strides = [1, 1]} : vector<16x32xf32> to vector<8x8xf32>
    %242 = vector.shape_cast %234 : vector<8x8xf32> to vector<1x8x8xf32>
    %243 = vector.shape_cast %235 : vector<8x8xf32> to vector<1x8x8xf32>
    %244 = vector.shape_cast %236 : vector<8x8xf32> to vector<1x8x8xf32>
    %245 = vector.shape_cast %237 : vector<8x8xf32> to vector<1x8x8xf32>
    %246 = vector.shape_cast %238 : vector<8x8xf32> to vector<1x8x8xf32>
    %247 = vector.shape_cast %239 : vector<8x8xf32> to vector<1x8x8xf32>
    %248 = vector.shape_cast %240 : vector<8x8xf32> to vector<1x8x8xf32>
    %249 = vector.shape_cast %241 : vector<8x8xf32> to vector<1x8x8xf32>
    %250 = tpu.concatenate %242, %243, %244, %245, %246, %247, %248, %249 in 0 : vector<1x8x8xf32>, vector<1x8x8xf32>, vector<1x8x8xf32>, vector<1x8x8xf32>, vector<1x8x8xf32>, vector<1x8x8xf32>, vector<1x8x8xf32>, vector<1x8x8xf32> -> vector<8x8x8xf32>
    "tpu.trace_start"() <{level = 10 : i32, message = "nqd,nkd->nqk"}> : () -> ()
    %cst_67 = arith.constant dense<0.000000e+00> : vector<8x8x8xf32>
    %251 = tpu.matmul %216, %233, %cst_67 {dimension_numbers = #tpu.dot_dimension_numbers<[2], [2], [1], [1], [0, 0, 0, 1, 1, 1], [0], [0]>} : vector<8x8x8xf32>, vector<8x8x8xf32>, vector<8x8x8xf32> -> vector<8x8x8xf32>
    "tpu.trace_stop"() : () -> ()
    %cst_68 = arith.constant dense<0xFF800000> : vector<8x8xf32>
    %252 = vector.multi_reduction <maximumf>, %251, %cst_68 [2] : vector<8x8x8xf32> to vector<8x8xf32>
    %253 = vector.shape_cast %252 : vector<8x8xf32> to vector<8x8x1xf32>
    %254 = vector.broadcast %253 : vector<8x8x1xf32> to vector<8x8x8xf32>
    %255 = arith.subf %251, %254 : vector<8x8x8xf32>
    %256 = math.exp %255 : vector<8x8x8xf32>
    %cst_69 = arith.constant dense<0.000000e+00> : vector<8x8xf32>
    %257 = vector.multi_reduction <add>, %256, %cst_69 [2] : vector<8x8x8xf32> to vector<8x8xf32>
    %258 = vector.shape_cast %257 : vector<8x8xf32> to vector<8x8x1xf32>
    %259 = tpu.reciprocal %258 {approx = true} : vector<8x8x1xf32> -> vector<8x8x1xf32>
    %260 = vector.broadcast %259 : vector<8x8x1xf32> to vector<8x8x8xf32>
    %261 = arith.mulf %256, %260 : vector<8x8x8xf32>
    "tpu.trace_start"() <{level = 10 : i32, message = "nqk,nkd->nqd"}> : () -> ()
    %cst_70 = arith.constant dense<0.000000e+00> : vector<8x8x8xf32>
    %262 = tpu.matmul %261, %250, %cst_70 {dimension_numbers = #tpu.dot_dimension_numbers<[2], [1], [1], [2], [0, 0, 0, 1, 1, 2], [0], [0]>} : vector<8x8x8xf32>, vector<8x8x8xf32>, vector<8x8x8xf32> -> vector<8x8x8xf32>
    "tpu.trace_stop"() : () -> ()
    %263 = vector.extract_strided_slice %262 {offsets = [0, 0, 0], sizes = [1, 8, 8], strides = [1, 1, 1]} : vector<8x8x8xf32> to vector<1x8x8xf32>
    %264 = vector.shape_cast %263 : vector<1x8x8xf32> to vector<8x8xf32>
    %265 = vector.extract_strided_slice %262 {offsets = [1, 0, 0], sizes = [1, 8, 8], strides = [1, 1, 1]} : vector<8x8x8xf32> to vector<1x8x8xf32>
    %266 = vector.shape_cast %265 : vector<1x8x8xf32> to vector<8x8xf32>
    %267 = vector.extract_strided_slice %262 {offsets = [2, 0, 0], sizes = [1, 8, 8], strides = [1, 1, 1]} : vector<8x8x8xf32> to vector<1x8x8xf32>
    %268 = vector.shape_cast %267 : vector<1x8x8xf32> to vector<8x8xf32>
    %269 = vector.extract_strided_slice %262 {offsets = [3, 0, 0], sizes = [1, 8, 8], strides = [1, 1, 1]} : vector<8x8x8xf32> to vector<1x8x8xf32>
    %270 = vector.shape_cast %269 : vector<1x8x8xf32> to vector<8x8xf32>
    %271 = tpu.concatenate %264, %266, %268, %270 in 1 : vector<8x8xf32>, vector<8x8xf32>, vector<8x8xf32>, vector<8x8xf32> -> vector<8x32xf32>
    %272 = vector.extract_strided_slice %262 {offsets = [4, 0, 0], sizes = [1, 8, 8], strides = [1, 1, 1]} : vector<8x8x8xf32> to vector<1x8x8xf32>
    %273 = vector.shape_cast %272 : vector<1x8x8xf32> to vector<8x8xf32>
    %274 = vector.extract_strided_slice %262 {offsets = [5, 0, 0], sizes = [1, 8, 8], strides = [1, 1, 1]} : vector<8x8x8xf32> to vector<1x8x8xf32>
    %275 = vector.shape_cast %274 : vector<1x8x8xf32> to vector<8x8xf32>
    %276 = vector.extract_strided_slice %262 {offsets = [6, 0, 0], sizes = [1, 8, 8], strides = [1, 1, 1]} : vector<8x8x8xf32> to vector<1x8x8xf32>
    %277 = vector.shape_cast %276 : vector<1x8x8xf32> to vector<8x8xf32>
    %278 = vector.extract_strided_slice %262 {offsets = [7, 0, 0], sizes = [1, 8, 8], strides = [1, 1, 1]} : vector<8x8x8xf32> to vector<1x8x8xf32>
    %279 = vector.shape_cast %278 : vector<1x8x8xf32> to vector<8x8xf32>
    %280 = tpu.concatenate %273, %275, %277, %279 in 1 : vector<8x8xf32>, vector<8x8xf32>, vector<8x8xf32>, vector<8x8xf32> -> vector<8x32xf32>
    %281 = tpu.concatenate %271, %280 in 0 : vector<8x32xf32>, vector<8x32xf32> -> vector<16x32xf32>
    %cst_71 = arith.constant dense<0.000000e+00> : vector<16x32xf32>
    %282 = tpu.matmul %281, %177, %cst_71 {dimension_numbers = #tpu.dot_dimension_numbers<[1], [0], [0], [1], [0, 0, 1, 1], [], []>} : vector<16x32xf32>, vector<32x32xf32>, vector<16x32xf32> -> vector<16x32xf32>
    %283 = vector.broadcast %186 : vector<1x32xf32> to vector<16x32xf32>
    %284 = arith.addf %282, %283 : vector<16x32xf32>
    %285 = arith.addf %171, %284 : vector<16x32xf32>
    %cst_72 = arith.constant dense<0.000000e+00> : vector<16xf32>
    %286 = vector.multi_reduction <add>, %285, %cst_72 [1] : vector<16x32xf32> to vector<16xf32>
    %287 = vector.shape_cast %286 : vector<16xf32> to vector<16x1xf32>
    %cst_73 = arith.constant 3.200000e+01 : f32
    %288 = vector.broadcast %cst_73 : f32 to vector<16x1xf32>
    %289 = arith.divf %287, %288 : vector<16x1xf32>
    %290 = vector.broadcast %289 : vector<16x1xf32> to vector<16x32xf32>
    %291 = arith.subf %285, %290 : vector<16x32xf32>
    %292 = arith.mulf %291, %291 : vector<16x32xf32>
    %cst_74 = arith.constant dense<0.000000e+00> : vector<16xf32>
    %293 = vector.multi_reduction <add>, %292, %cst_74 [1] : vector<16x32xf32> to vector<16xf32>
    %294 = vector.shape_cast %293 : vector<16xf32> to vector<16x1xf32>
    %cst_75 = arith.constant 3.200000e+01 : f32
    %295 = vector.broadcast %cst_75 : f32 to vector<16x1xf32>
    %296 = arith.divf %294, %295 : vector<16x1xf32>
    %297 = vector.broadcast %289 : vector<16x1xf32> to vector<16x32xf32>
    %298 = arith.subf %285, %297 : vector<16x32xf32>
    %cst_76 = arith.constant 9.99999974E-6 : f32
    %299 = vector.broadcast %cst_76 : f32 to vector<16x1xf32>
    %300 = arith.addf %296, %299 : vector<16x1xf32>
    %301 = math.rsqrt %300 : vector<16x1xf32>
    %302 = vector.broadcast %301 : vector<16x1xf32> to vector<16x32xf32>
    %303 = arith.mulf %298, %302 : vector<16x32xf32>
    %304 = vector.broadcast %187 : vector<1x32xf32> to vector<16x32xf32>
    %305 = arith.mulf %303, %304 : vector<16x32xf32>
    %306 = vector.broadcast %188 : vector<1x32xf32> to vector<16x32xf32>
    %307 = arith.addf %305, %306 : vector<16x32xf32>
    %cst_77 = arith.constant dense<0.000000e+00> : vector<16x64xf32>
    %308 = tpu.matmul %307, %179, %cst_77 {dimension_numbers = #tpu.dot_dimension_numbers<[1], [0], [0], [1], [0, 0, 1, 1], [], []>} : vector<16x32xf32>, vector<32x64xf32>, vector<16x64xf32> -> vector<16x64xf32>
    %309 = vector.broadcast %181 : vector<1x64xf32> to vector<16x64xf32>
    %310 = arith.addf %308, %309 : vector<16x64xf32>
    %cst_78 = arith.constant 0.000000e+00 : f32
    %311 = vector.broadcast %cst_78 : f32 to vector<16x64xf32>
    %312 = arith.maximumf %310, %311 : vector<16x64xf32>
    %cst_79 = arith.constant dense<0.000000e+00> : vector<16x32xf32>
    %313 = tpu.matmul %312, %183, %cst_79 {dimension_numbers = #tpu.dot_dimension_numbers<[1], [0], [0], [1], [0, 0, 1, 1], [], []>} : vector<16x64xf32>, vector<64x32xf32>, vector<16x32xf32> -> vector<16x32xf32>
    %314 = vector.broadcast %189 : vector<1x32xf32> to vector<16x32xf32>
    %315 = arith.addf %313, %314 : vector<16x32xf32>
    %316 = arith.addf %307, %315 : vector<16x32xf32>
    %cst_80 = arith.constant dense<0.000000e+00> : vector<16xf32>
    %317 = vector.multi_reduction <add>, %316, %cst_80 [1] : vector<16x32xf32> to vector<16xf32>
    %318 = vector.shape_cast %317 : vector<16xf32> to vector<16x1xf32>
    %cst_81 = arith.constant 3.200000e+01 : f32
    %319 = vector.broadcast %cst_81 : f32 to vector<16x1xf32>
    %320 = arith.divf %318, %319 : vector<16x1xf32>
    %321 = vector.broadcast %320 : vector<16x1xf32> to vector<16x32xf32>
    %322 = arith.subf %316, %321 : vector<16x32xf32>
    %323 = arith.mulf %322, %322 : vector<16x32xf32>
    %cst_82 = arith.constant dense<0.000000e+00> : vector<16xf32>
    %324 = vector.multi_reduction <add>, %323, %cst_82 [1] : vector<16x32xf32> to vector<16xf32>
    %325 = vector.shape_cast %324 : vector<16xf32> to vector<16x1xf32>
    %cst_83 = arith.constant 3.200000e+01 : f32
    %326 = vector.broadcast %cst_83 : f32 to vector<16x1xf32>
    %327 = arith.divf %325, %326 : vector<16x1xf32>
    %328 = vector.broadcast %320 : vector<16x1xf32> to vector<16x32xf32>
    %329 = arith.subf %316, %328 : vector<16x32xf32>
    %cst_84 = arith.constant 9.99999974E-6 : f32
    %330 = vector.broadcast %cst_84 : f32 to vector<16x1xf32>
    %331 = arith.addf %327, %330 : vector<16x1xf32>
    %332 = math.rsqrt %331 : vector<16x1xf32>
    %333 = vector.broadcast %332 : vector<16x1xf32> to vector<16x32xf32>
    %334 = arith.mulf %329, %333 : vector<16x32xf32>
    %335 = vector.broadcast %190 : vector<1x32xf32> to vector<16x32xf32>
    %336 = arith.mulf %334, %335 : vector<16x32xf32>
    %337 = vector.broadcast %191 : vector<1x32xf32> to vector<16x32xf32>
    %338 = arith.addf %336, %337 : vector<16x32xf32>
    %339 = vector.extract_strided_slice %338 {offsets = [0, 0], sizes = [8, 32], strides = [1, 1]} : vector<16x32xf32> to vector<8x32xf32>
    %c0_85 = arith.constant 0 : index
    %c0_86 = arith.constant 0 : index
    %c0_87 = arith.constant 0 : index
    %340 = vector.load %arg8[%c0_85, %c0_86, %c0_87] : memref<2x8x32xf32, #tpu.memory_space<vmem>>, vector<1x8x32xf32>
    %341 = vector.shape_cast %340 : vector<1x8x32xf32> to vector<8x32xf32>
    %342 = vector.shape_cast %339 : vector<8x32xf32> to vector<1x8x32xf32>
    tpu.vector_store %arg8[%c0_85, %c0_86, %c0_87], %342 {strides = array<i32>} : memref<2x8x32xf32, #tpu.memory_space<vmem>>, vector<1x8x32xf32>,
    %343 = vector.extract_strided_slice %338 {offsets = [8, 0], sizes = [8, 32], strides = [1, 1]} : vector<16x32xf32> to vector<8x32xf32>
    %c1_88 = arith.constant 1 : index
    %c0_89 = arith.constant 0 : index
    %c0_90 = arith.constant 0 : index
    %344 = vector.load %arg8[%c1_88, %c0_89, %c0_90] : memref<2x8x32xf32, #tpu.memory_space<vmem>>, vector<1x8x32xf32>
    %345 = vector.shape_cast %344 : vector<1x8x32xf32> to vector<8x32xf32>
    %346 = vector.shape_cast %343 : vector<8x32xf32> to vector<1x8x32xf32>
    tpu.vector_store %arg8[%c1_88, %c0_89, %c0_90], %346 {strides = array<i32>} : memref<2x8x32xf32, #tpu.memory_space<vmem>>, vector<1x8x32xf32>,
    return
  }
}

</mosaic_0001>

<llo_original>
// kernel: transformer_encoder.1
$region0: #{transformer_encoder.1}
  #allocation0 [shape = 'u32[]', space=smem, size = 0x4, offset = 0x4, fixed_abs, tag = 'smem constant byte address 0x4 - core index']
  #allocation1 [shape = 'u32[72,128]{1,0:T(1,128)}', space=vmem, size = 0x9000, scoped, tag = 'internal scratch']
  %s0 = inlined_call_operand.vmem [shape: f32[2,8,32], index: 0, kind: input, shape index: {}]
  %s1 = inlined_call_operand.vmem [shape: f32[2,32,96], index: 1, kind: input, shape index: {}]
  %s2 = inlined_call_operand.vmem [shape: f32[2,1,96], index: 2, kind: input, shape index: {}]
  %s3 = inlined_call_operand.vmem [shape: f32[2,32,32], index: 3, kind: input, shape index: {}]
  %s4 = inlined_call_operand.vmem [shape: f32[2,6,32], index: 4, kind: input, shape index: {}]
  %s5 = inlined_call_operand.vmem [shape: f32[2,32,64], index: 5, kind: input, shape index: {}]
  %s6 = inlined_call_operand.hbm [shape: f32[2,1,64], index: 6, kind: input, shape index: {}]
  %s7 = inlined_call_operand.vmem [shape: f32[2,64,32], index: 7, kind: input, shape index: {}]
  %s8 = inlined_call_operand.vmem [shape: f32[2,8,32], index: 8, kind: output, shape index: {}]
  %s9 = sld [smem:[#allocation0]]
  $region46: #{transformer_encoder.1} parent=0
    _
  %s11 = ssub.s32 1, %s9
  %s12 = scalar_select 0, %s11, %s9
  $region1: #{transformer_encoder.1} parent=0
    #allocation2 [shape = 'u8[1024]{0}', space=vmem, size = 0x400, scoped, tag = 'input window, operand 6, single buffered']
    #allocation3 [shape = 's32[1]{0}', space=sflag, size = 0x4, scoped, tag = 'scoped memory for transformer_encoder.1']
    %13 = vsyncpa [#allocation3], 0
    // Predicated region
    $region2: #{transformer_encoder.1} parent=1 // pred_check
      _
    $region3: #{transformer_encoder.1} parent=1 // pred_check_branch
      %15 = sbr.rel (0) target = $region5
    $region4: #{transformer_encoder.1} parent=1 // pred_region
      _
    $region5: #{transformer_encoder.1} parent=1 // pred_fallthru
      _
    // Predicated region
    $region6: #{transformer_encoder.1} parent=1 // pred_check
      _
    $region7: #{transformer_encoder.1} parent=1 // pred_check_branch
      %17 = sbr.rel (0) target = $region9
    $region8: #{transformer_encoder.1} parent=1 // pred_region
      _
    $region9: #{transformer_encoder.1} parent=1 // pred_fallthru
      _
    // Predicated region
    $region10: #{transformer_encoder.1} parent=1 // pred_check
      _
    $region11: #{transformer_encoder.1} parent=1 // pred_check_branch
      %19 = sbr.rel (0) target = $region13
    $region12: #{transformer_encoder.1} parent=1 // pred_region
      _
    $region13: #{transformer_encoder.1} parent=1 // pred_fallthru
      _
    // Predicated region
    $region14: #{transformer_encoder.1} parent=1 // pred_check
      _
    $region15: #{transformer_encoder.1} parent=1 // pred_check_branch
      %21 = sbr.rel (0) target = $region17
    $region16: #{transformer_encoder.1} parent=1 // pred_region
      _
    $region17: #{transformer_encoder.1} parent=1 // pred_fallthru
      _
    // Predicated region
    $region18: #{transformer_encoder.1} parent=1 // pred_check
      _
    $region19: #{transformer_encoder.1} parent=1 // pred_check_branch
      %23 = sbr.rel (0) target = $region21
    $region20: #{transformer_encoder.1} parent=1 // pred_region
      _
    $region21: #{transformer_encoder.1} parent=1 // pred_fallthru
      _
    // Predicated region
    $region22: #{transformer_encoder.1} parent=1 // pred_check
      _
    $region23: #{transformer_encoder.1} parent=1 // pred_check_branch
      %25 = sbr.rel (0) target = $region25
    $region24: #{transformer_encoder.1} parent=1 // pred_region
      _
    $region25: #{transformer_encoder.1} parent=1 // pred_fallthru
      _
    // Predicated region
    $region26: #{transformer_encoder.1} parent=1 // pred_check
      _
    $region27: #{transformer_encoder.1} parent=1 // pred_check_branch
      %27 = sbr.rel (0) target = $region29
    $region28: #{transformer_encoder.1} parent=1 // pred_region
      %29 = vsyncadd [#allocation3], 0
      %s30 = sshll.u32 %s6, 4
      %s31 = int_to_ptr.hbm [resolvable:$true] %s30
      %s32 = sshll.u32 [#allocation2], 4
      %s33 = int_to_ptr.vmem [resolvable:$true] %s32
      %38 = dma.hbm_to_vmem [thread:$0]  %s31, 32, %s33, [#allocation3], 16, 16, 1
    $region29: #{transformer_encoder.1} parent=1 // pred_fallthru
      _
    // Predicated region
    $region30: #{transformer_encoder.1} parent=1 // pred_check
      _
    $region31: #{transformer_encoder.1} parent=1 // pred_check_branch
      %40 = sbr.rel (0) target = $region33
    $region32: #{transformer_encoder.1} parent=1 // pred_region
      _
    $region33: #{transformer_encoder.1} parent=1 // pred_fallthru
      _
    // Predicated region
    $region34: #{transformer_encoder.1} parent=1 // pred_check
      _
    $region35: #{transformer_encoder.1} parent=1 // pred_check_branch
      %42 = sbr.rel (0) target = $region37
    $region36: #{transformer_encoder.1} parent=1 // pred_region
      %44 = dma.done [#allocation3], 32
    $region37: #{transformer_encoder.1} parent=1 // pred_fallthru
      _
    %v45 = vld [vmem:[%s0] sm:$0xff]
    %s46 = scalar_lea.vmem %s0, 8
    %v47 = vld [vmem:[%s46] sm:$0xff]
    %v48 = vld [vmem:[%s1] sm:$0xff]
    %v49 = vld [vmem:[%s1 + $0x8] sm:$0xff]
    %v50 = vld [vmem:[%s1 + $0x10] sm:$0xff]
    %v51 = vld [vmem:[%s1 + $0x18] sm:$0xff]
    %v52 = vld [vmem:[%s2] sm:$0x1]
    %v53 = vld [vmem:[%s3] sm:$0xff]
    %v54 = vld [vmem:[%s3 + $0x8] sm:$0xff]
    %v55 = vld [vmem:[%s3 + $0x10] sm:$0xff]
    %v56 = vld [vmem:[%s3 + $0x18] sm:$0xff]
    %v57 = vld [vmem:[%s5] sm:$0xff]
    %v58 = vld [vmem:[%s5 + $0x8] sm:$0xff]
    %v59 = vld [vmem:[%s5 + $0x10] sm:$0xff]
    %v60 = vld [vmem:[%s5 + $0x18] sm:$0xff]
    %v61 = vld [vmem:[#allocation2] sm:$0x1]
    %v62 = vld [vmem:[%s7] sm:$0xff]
    %v63 = vld [vmem:[%s7 + $0x8] sm:$0xff]
    %v64 = vld [vmem:[%s7 + $0x10] sm:$0xff]
    %v65 = vld [vmem:[%s7 + $0x18] sm:$0xff]
    %v66 = vld [vmem:[%s7 + $0x20] sm:$0xff]
    %v67 = vld [vmem:[%s7 + $0x28] sm:$0xff]
    %v68 = vld [vmem:[%s7 + $0x30] sm:$0xff]
    %v69 = vld [vmem:[%s7 + $0x38] sm:$0xff]
    %v70 = vld [vmem:[%s4] sm:$0x3f]
    %v72 = vperm.slane %v52, 0
    %vm74 = vcmask 261120
    %v76 = vsel %vm74, %v45, 0
    %v79 = vsel %vm74, %v47, 0
    %81 = vmatpush.msra.mxu0 0.0
    %82 = vmatpush.msra.mxu0 0.0
    %83 = vmatpush.msra.mxu0 0.0
    %84 = vmatpush.msra.mxu0 0.0
    %85 = vmatpush.msra.mxu0 0.0
    %86 = vmatpush.msra.mxu0 0.0
    %87 = vmatpush.msra.mxu0 0.0
    %88 = vmatpush.msra.mxu0 0.0
    %89 = vmatpush.msra.mxu0 0.0
    %90 = vmatpush.msra.mxu0 0.0
    %91 = vmatpush.msra.mxu0 0.0
    %92 = vmatpush.msra.mxu0 0.0
    %93 = vmatpush.msra.mxu0 %v51
    %94 = vmatpush.msra.mxu0 %v50
    %95 = vmatpush.msra.mxu0 %v49
    %96 = vmatpush.msra.mxu0 %v48
    %97 = vmatmul.f32.gmra.mxu0 %v76
    %v98 = vpop.f32.mrf.mxu0
    %v99 = vadd.f32 %v72, %v98
    %100 = vmatmul.f32.gmra.mxu0 %v79
    %v101 = vpop.f32.mrf.mxu0
    %v102 = vadd.f32 %v72, %v101
    %103 = vdwg.mxu0
    %v104 = vmul.f32 %v99, 0.35355338
    %v105 = vmul.f32 %v102, 0.35355338
    %107 = vrot.lane.b32.xlu0 %v104, 120
    %v108 = vpop.permute.xlu0 %107
    %109 = vrot.lane.b32.xlu0 %v104, 112
    %v110 = vpop.permute.xlu0 %109
    %111 = vrot.lane.b32.xlu0 %v104, 104
    %v112 = vpop.permute.xlu0 %111
    %114 = vrot.lane.b32.xlu0 %v105, 120
    %v115 = vpop.permute.xlu0 %114
    %116 = vrot.lane.b32.xlu0 %v105, 112
    %v117 = vpop.permute.xlu0 %116
    %118 = vrot.lane.b32.xlu0 %v105, 104
    %v119 = vpop.permute.xlu0 %118
    %121 = vrot.lane.b32.xlu0 %v99, 120
    %v122 = vpop.permute.xlu0 %121
    %123 = vrot.lane.b32.xlu0 %v99, 112
    %v124 = vpop.permute.xlu0 %123
    %125 = vrot.lane.b32.xlu0 %v99, 104
    %v126 = vpop.permute.xlu0 %125
    %128 = vrot.lane.b32.xlu0 %v102, 120
    %v129 = vpop.permute.xlu0 %128
    %130 = vrot.lane.b32.xlu0 %v102, 112
    %v131 = vpop.permute.xlu0 %130
    %132 = vrot.lane.b32.xlu0 %v102, 104
    %v133 = vpop.permute.xlu0 %132
    %134 = vrot.lane.b32.xlu0 %v99, 96
    %v135 = vpop.permute.xlu0 %134
    %vm136 = vcmask 64512
    %v137 = vsel %vm136, %v104, 0
    %v139 = vsel %vm136, %v135, 0
    %141 = vmatpush.xpose.msra.mxu0 0.0
    %142 = vmatpush.xpose.msra.mxu0 0.0
    %143 = vmatpush.xpose.msra.mxu0 0.0
    %144 = vmatpush.xpose.msra.mxu0 0.0
    %145 = vmatpush.xpose.msra.mxu0 0.0
    %146 = vmatpush.xpose.msra.mxu0 0.0
    %147 = vmatpush.xpose.msra.mxu0 0.0
    %148 = vmatpush.xpose.msra.mxu0 0.0
    %149 = vmatpush.xpose.msra.mxu0 0.0
    %150 = vmatpush.xpose.msra.mxu0 0.0
    %151 = vmatpush.xpose.msra.mxu0 0.0
    %152 = vmatpush.xpose.msra.mxu0 0.0
    %153 = vmatpush.xpose.msra.mxu0 0.0
    %154 = vmatpush.xpose.msra.mxu0 0.0
    %155 = vmatpush.xpose.msra.mxu0 0.0
    %156 = vmatpush.xpose.msra.mxu0 %v139
    %157 = vmatmul.f32.gmra.mxu0 %v137
    %v158 = vpop.f32.mrf.mxu0
    %v159 = vadd.f32 0.0, %v158
    %160 = vdwg.mxu0
    %161 = vrot.lane.b32.xlu0 %v122, 96
    %v162 = vpop.permute.xlu0 %161
    %v163 = vsel %vm136, %v108, 0
    %v165 = vsel %vm136, %v162, 0
    %167 = vmatpush.xpose.msra.mxu0 0.0
    %168 = vmatpush.xpose.msra.mxu0 0.0
    %169 = vmatpush.xpose.msra.mxu0 0.0
    %170 = vmatpush.xpose.msra.mxu0 0.0
    %171 = vmatpush.xpose.msra.mxu0 0.0
    %172 = vmatpush.xpose.msra.mxu0 0.0
    %173 = vmatpush.xpose.msra.mxu0 0.0
    %174 = vmatpush.xpose.msra.mxu0 0.0
    %175 = vmatpush.xpose.msra.mxu0 0.0
    %176 = vmatpush.xpose.msra.mxu0 0.0
    %177 = vmatpush.xpose.msra.mxu0 0.0
    %178 = vmatpush.xpose.msra.mxu0 0.0
    %179 = vmatpush.xpose.msra.mxu0 0.0
    %180 = vmatpush.xpose.msra.mxu0 0.0
    %181 = vmatpush.xpose.msra.mxu0 0.0
    %182 = vmatpush.xpose.msra.mxu0 %v165
    %183 = vmatmul.f32.gmra.mxu0 %v163
    %v184 = vpop.f32.mrf.mxu0
    %v185 = vadd.f32 0.0, %v184
    %186 = vdwg.mxu0
    %187 = vrot.lane.b32.xlu0 %v124, 96
    %v188 = vpop.permute.xlu0 %187
    %v189 = vsel %vm136, %v110, 0
    %v191 = vsel %vm136, %v188, 0
    %193 = vmatpush.xpose.msra.mxu0 0.0
    %194 = vmatpush.xpose.msra.mxu0 0.0
    %195 = vmatpush.xpose.msra.mxu0 0.0
    %196 = vmatpush.xpose.msra.mxu0 0.0
    %197 = vmatpush.xpose.msra.mxu0 0.0
    %198 = vmatpush.xpose.msra.mxu0 0.0
    %199 = vmatpush.xpose.msra.mxu0 0.0
    %200 = vmatpush.xpose.msra.mxu0 0.0
    %201 = vmatpush.xpose.msra.mxu0 0.0
    %202 = vmatpush.xpose.msra.mxu0 0.0
    %203 = vmatpush.xpose.msra.mxu0 0.0
    %204 = vmatpush.xpose.msra.mxu0 0.0
    %205 = vmatpush.xpose.msra.mxu0 0.0
    %206 = vmatpush.xpose.msra.mxu0 0.0
    %207 = vmatpush.xpose.msra.mxu0 0.0
    %208 = vmatpush.xpose.msra.mxu0 %v191
    %209 = vmatmul.f32.gmra.mxu0 %v189
    %v210 = vpop.f32.mrf.mxu0
    %v211 = vadd.f32 0.0, %v210
    %212 = vdwg.mxu0
    %213 = vrot.lane.b32.xlu0 %v126, 96
    %v214 = vpop.permute.xlu0 %213
    %v215 = vsel %vm136, %v112, 0
    %v217 = vsel %vm136, %v214, 0
    %219 = vmatpush.xpose.msra.mxu0 0.0
    %220 = vmatpush.xpose.msra.mxu0 0.0
    %221 = vmatpush.xpose.msra.mxu0 0.0
    %222 = vmatpush.xpose.msra.mxu0 0.0
    %223 = vmatpush.xpose.msra.mxu0 0.0
    %224 = vmatpush.xpose.msra.mxu0 0.0
    %225 = vmatpush.xpose.msra.mxu0 0.0
    %226 = vmatpush.xpose.msra.mxu0 0.0
    %227 = vmatpush.xpose.msra.mxu0 0.0
    %228 = vmatpush.xpose.msra.mxu0 0.0
    %229 = vmatpush.xpose.msra.mxu0 0.0
    %230 = vmatpush.xpose.msra.mxu0 0.0
    %231 = vmatpush.xpose.msra.mxu0 0.0
    %232 = vmatpush.xpose.msra.mxu0 0.0
    %233 = vmatpush.xpose.msra.mxu0 0.0
    %234 = vmatpush.xpose.msra.mxu0 %v217
    %235 = vmatmul.f32.gmra.mxu0 %v215
    %v236 = vpop.f32.mrf.mxu0
    %v237 = vadd.f32 0.0, %v236
    %238 = vdwg.mxu0
    %239 = vrot.lane.b32.xlu0 %v102, 96
    %v240 = vpop.permute.xlu0 %239
    %v241 = vsel %vm136, %v105, 0
    %v243 = vsel %vm136, %v240, 0
    %245 = vmatpush.xpose.msra.mxu0 0.0
    %246 = vmatpush.xpose.msra.mxu0 0.0
    %247 = vmatpush.xpose.msra.mxu0 0.0
    %248 = vmatpush.xpose.msra.mxu0 0.0
    %249 = vmatpush.xpose.msra.mxu0 0.0
    %250 = vmatpush.xpose.msra.mxu0 0.0
    %251 = vmatpush.xpose.msra.mxu0 0.0
    %252 = vmatpush.xpose.msra.mxu0 0.0
    %253 = vmatpush.xpose.msra.mxu0 0.0
    %254 = vmatpush.xpose.msra.mxu0 0.0
    %255 = vmatpush.xpose.msra.mxu0 0.0
    %256 = vmatpush.xpose.msra.mxu0 0.0
    %257 = vmatpush.xpose.msra.mxu0 0.0
    %258 = vmatpush.xpose.msra.mxu0 0.0
    %259 = vmatpush.xpose.msra.mxu0 0.0
    %260 = vmatpush.xpose.msra.mxu0 %v243
    %261 = vmatmul.f32.gmra.mxu0 %v241
    %v262 = vpop.f32.mrf.mxu0
    %v263 = vadd.f32 0.0, %v262
    %264 = vdwg.mxu0
    %265 = vrot.lane.b32.xlu0 %v129, 96
    %v266 = vpop.permute.xlu0 %265
    %v267 = vsel %vm136, %v115, 0
    %v269 = vsel %vm136, %v266, 0
    %271 = vmatpush.xpose.msra.mxu0 0.0
    %272 = vmatpush.xpose.msra.mxu0 0.0
    %273 = vmatpush.xpose.msra.mxu0 0.0
    %274 = vmatpush.xpose.msra.mxu0 0.0
    %275 = vmatpush.xpose.msra.mxu0 0.0
    %276 = vmatpush.xpose.msra.mxu0 0.0
    %277 = vmatpush.xpose.msra.mxu0 0.0
    %278 = vmatpush.xpose.msra.mxu0 0.0
    %279 = vmatpush.xpose.msra.mxu0 0.0
    %280 = vmatpush.xpose.msra.mxu0 0.0
    %281 = vmatpush.xpose.msra.mxu0 0.0
    %282 = vmatpush.xpose.msra.mxu0 0.0
    %283 = vmatpush.xpose.msra.mxu0 0.0
    %284 = vmatpush.xpose.msra.mxu0 0.0
    %285 = vmatpush.xpose.msra.mxu0 0.0
    %286 = vmatpush.xpose.msra.mxu0 %v269
    %287 = vmatmul.f32.gmra.mxu0 %v267
    %v288 = vpop.f32.mrf.mxu0
    %v289 = vadd.f32 0.0, %v288
    %290 = vdwg.mxu0
    %291 = vrot.lane.b32.xlu0 %v131, 96
    %v292 = vpop.permute.xlu0 %291
    %v293 = vsel %vm136, %v117, 0
    %v295 = vsel %vm136, %v292, 0
    %297 = vmatpush.xpose.msra.mxu0 0.0
    %298 = vmatpush.xpose.msra.mxu0 0.0
    %299 = vmatpush.xpose.msra.mxu0 0.0
    %300 = vmatpush.xpose.msra.mxu0 0.0
    %301 = vmatpush.xpose.msra.mxu0 0.0
    %302 = vmatpush.xpose.msra.mxu0 0.0
    %303 = vmatpush.xpose.msra.mxu0 0.0
    %304 = vmatpush.xpose.msra.mxu0 0.0
    %305 = vmatpush.xpose.msra.mxu0 0.0
    %306 = vmatpush.xpose.msra.mxu0 0.0
    %307 = vmatpush.xpose.msra.mxu0 0.0
    %308 = vmatpush.xpose.msra.mxu0 0.0
    %309 = vmatpush.xpose.msra.mxu0 0.0
    %310 = vmatpush.xpose.msra.mxu0 0.0
    %311 = vmatpush.xpose.msra.mxu0 0.0
    %312 = vmatpush.xpose.msra.mxu0 %v295
    %313 = vmatmul.f32.gmra.mxu0 %v293
    %v314 = vpop.f32.mrf.mxu0
    %v315 = vadd.f32 0.0, %v314
    %316 = vdwg.mxu0
    %317 = vrot.lane.b32.xlu0 %v133, 96
    %v318 = vpop.permute.xlu0 %317
    %v319 = vsel %vm136, %v119, 0
    %v321 = vsel %vm136, %v318, 0
    %323 = vmatpush.xpose.msra.mxu0 0.0
    %324 = vmatpush.xpose.msra.mxu0 0.0
    %325 = vmatpush.xpose.msra.mxu0 0.0
    %326 = vmatpush.xpose.msra.mxu0 0.0
    %327 = vmatpush.xpose.msra.mxu0 0.0
    %328 = vmatpush.xpose.msra.mxu0 0.0
    %329 = vmatpush.xpose.msra.mxu0 0.0
    %330 = vmatpush.xpose.msra.mxu0 0.0
    %331 = vmatpush.xpose.msra.mxu0 0.0
    %332 = vmatpush.xpose.msra.mxu0 0.0
    %333 = vmatpush.xpose.msra.mxu0 0.0
    %334 = vmatpush.xpose.msra.mxu0 0.0
    %335 = vmatpush.xpose.msra.mxu0 0.0
    %336 = vmatpush.xpose.msra.mxu0 0.0
    %337 = vmatpush.xpose.msra.mxu0 0.0
    %338 = vmatpush.xpose.msra.mxu0 %v321
    %339 = vmatmul.f32.gmra.mxu0 %v319
    %v340 = vpop.f32.mrf.mxu0
    %v341 = vadd.f32 0.0, %v340
    %342 = vdwg.mxu0
    %v343 = vsel %vm136, %v159, -inf
    %344 = vmax.xlane.f32.xlu0 %v343
    %v345 = vpop.xlane.xlu0 %344
    %v346 = vsel %vm136, %v185, -inf
    %347 = vmax.xlane.f32.xlu0 %v346
    %v348 = vpop.xlane.xlu0 %347
    %v349 = vsel %vm136, %v211, -inf
    %350 = vmax.xlane.f32.xlu0 %v349
    %v351 = vpop.xlane.xlu0 %350
    %v352 = vsel %vm136, %v237, -inf
    %353 = vmax.xlane.f32.xlu0 %v352
    %v354 = vpop.xlane.xlu0 %353
    %v355 = vsel %vm136, %v263, -inf
    %356 = vmax.xlane.f32.xlu0 %v355
    %v357 = vpop.xlane.xlu0 %356
    %v358 = vsel %vm136, %v289, -inf
    %359 = vmax.xlane.f32.xlu0 %v358
    %v360 = vpop.xlane.xlu0 %359
    %v361 = vsel %vm136, %v315, -inf
    %362 = vmax.xlane.f32.xlu0 %v361
    %v363 = vpop.xlane.xlu0 %362
    %v364 = vsel %vm136, %v341, -inf
    %365 = vmax.xlane.f32.xlu0 %v364
    %v366 = vpop.xlane.xlu0 %365
    %v367 = vsub.f32 %v159, %v345
    %v368 = vsub.f32 %v185, %v348
    %v369 = vsub.f32 %v211, %v351
    %v370 = vsub.f32 %v237, %v354
    %v371 = vsub.f32 %v263, %v357
    %v372 = vsub.f32 %v289, %v360
    %v373 = vsub.f32 %v315, %v363
    %v374 = vsub.f32 %v341, %v366
    %v375 = vmul.f32 %v367, 1.442695
    %v376 = vpow.pop %v375
    %v377 = vmul.f32 %v368, 1.442695
    %v378 = vpow.pop %v377
    %v379 = vmul.f32 %v369, 1.442695
    %v380 = vpow.pop %v379
    %v381 = vmul.f32 %v370, 1.442695
    %v382 = vpow.pop %v381
    %v383 = vmul.f32 %v371, 1.442695
    %v384 = vpow.pop %v383
    %v385 = vmul.f32 %v372, 1.442695
    %v386 = vpow.pop %v385
    %v387 = vmul.f32 %v373, 1.442695
    %v388 = vpow.pop %v387
    %v389 = vmul.f32 %v374, 1.442695
    %v390 = vpow.pop %v389
    %v391 = vsel %vm136, %v376, 0.0
    %392 = vadd.xlane.f32.xlu0 %v391
    %v393 = vpop.xlane.xlu0 %392
    %v394 = vsel %vm136, %v378, 0.0
    %395 = vadd.xlane.f32.xlu0 %v394
    %v396 = vpop.xlane.xlu0 %395
    %v397 = vsel %vm136, %v380, 0.0
    %398 = vadd.xlane.f32.xlu0 %v397
    %v399 = vpop.xlane.xlu0 %398
    %v400 = vsel %vm136, %v382, 0.0
    %401 = vadd.xlane.f32.xlu0 %v400
    %v402 = vpop.xlane.xlu0 %401
    %v403 = vsel %vm136, %v384, 0.0
    %404 = vadd.xlane.f32.xlu0 %v403
    %v405 = vpop.xlane.xlu0 %404
    %v406 = vsel %vm136, %v386, 0.0
    %407 = vadd.xlane.f32.xlu0 %v406
    %v408 = vpop.xlane.xlu0 %407
    %v409 = vsel %vm136, %v388, 0.0
    %410 = vadd.xlane.f32.xlu0 %v409
    %v411 = vpop.xlane.xlu0 %410
    %v412 = vsel %vm136, %v390, 0.0
    %413 = vadd.xlane.f32.xlu0 %v412
    %v414 = vpop.xlane.xlu0 %413
    %v415 = vrcp.pop %v393
    %v416 = vrcp.pop %v396
    %v417 = vrcp.pop %v399
    %v418 = vrcp.pop %v402
    %v419 = vrcp.pop %v405
    %v420 = vrcp.pop %v408
    %v421 = vrcp.pop %v411
    %v422 = vrcp.pop %v414
    %v423 = vmul.f32 %v376, %v415
    %v424 = vmul.f32 %v378, %v416
    %v425 = vmul.f32 %v380, %v417
    %v426 = vmul.f32 %v382, %v418
    %v427 = vmul.f32 %v384, %v419
    %v428 = vmul.f32 %v386, %v420
    %v429 = vmul.f32 %v388, %v421
    %v430 = vmul.f32 %v390, %v422
    %431 = vrot.lane.b32.xlu0 %v99, 64
    %v432 = vpop.permute.xlu0 %431
    %v435 = vsel %vm136, %v423, 0
    %437 = vmatpush.msra.mxu0 0.0
    %438 = vmatpush.msra.mxu0 0.0
    %439 = vmatpush.msra.mxu0 0.0
    %440 = vmatpush.msra.mxu0 0.0
    %441 = vmatpush.msra.mxu0 0.0
    %442 = vmatpush.msra.mxu0 0.0
    %443 = vmatpush.msra.mxu0 0.0
    %444 = vmatpush.msra.mxu0 0.0
    %445 = vmatpush.msra.mxu0 0.0
    %446 = vmatpush.msra.mxu0 0.0
    %447 = vmatpush.msra.mxu0 0.0
    %448 = vmatpush.msra.mxu0 0.0
    %449 = vmatpush.msra.mxu0 0.0
    %450 = vmatpush.msra.mxu0 0.0
    %451 = vmatpush.msra.mxu0 0.0
    %452 = vmatpush.msra.mxu0 %v432
    %453 = vmatmul.f32.gmra.mxu0 %v435
    %v454 = vpop.f32.mrf.mxu0
    %v455 = vadd.f32 0.0, %v454
    %456 = vdwg.mxu0
    %457 = vrot.lane.b32.xlu0 %v122, 64
    %v458 = vpop.permute.xlu0 %457
    %v461 = vsel %vm136, %v424, 0
    %463 = vmatpush.msra.mxu0 0.0
    %464 = vmatpush.msra.mxu0 0.0
    %465 = vmatpush.msra.mxu0 0.0
    %466 = vmatpush.msra.mxu0 0.0
    %467 = vmatpush.msra.mxu0 0.0
    %468 = vmatpush.msra.mxu0 0.0
    %469 = vmatpush.msra.mxu0 0.0
    %470 = vmatpush.msra.mxu0 0.0
    %471 = vmatpush.msra.mxu0 0.0
    %472 = vmatpush.msra.mxu0 0.0
    %473 = vmatpush.msra.mxu0 0.0
    %474 = vmatpush.msra.mxu0 0.0
    %475 = vmatpush.msra.mxu0 0.0
    %476 = vmatpush.msra.mxu0 0.0
    %477 = vmatpush.msra.mxu0 0.0
    %478 = vmatpush.msra.mxu0 %v458
    %479 = vmatmul.f32.gmra.mxu0 %v461
    %v480 = vpop.f32.mrf.mxu0
    %v481 = vadd.f32 0.0, %v480
    %482 = vdwg.mxu0
    %483 = vrot.lane.b32.xlu0 %v124, 64
    %v484 = vpop.permute.xlu0 %483
    %v487 = vsel %vm136, %v425, 0
    %489 = vmatpush.msra.mxu0 0.0
    %490 = vmatpush.msra.mxu0 0.0
    %491 = vmatpush.msra.mxu0 0.0
    %492 = vmatpush.msra.mxu0 0.0
    %493 = vmatpush.msra.mxu0 0.0
    %494 = vmatpush.msra.mxu0 0.0
    %495 = vmatpush.msra.mxu0 0.0
    %496 = vmatpush.msra.mxu0 0.0
    %497 = vmatpush.msra.mxu0 0.0
    %498 = vmatpush.msra.mxu0 0.0
    %499 = vmatpush.msra.mxu0 0.0
    %500 = vmatpush.msra.mxu0 0.0
    %501 = vmatpush.msra.mxu0 0.0
    %502 = vmatpush.msra.mxu0 0.0
    %503 = vmatpush.msra.mxu0 0.0
    %504 = vmatpush.msra.mxu0 %v484
    %505 = vmatmul.f32.gmra.mxu0 %v487
    %v506 = vpop.f32.mrf.mxu0
    %v507 = vadd.f32 0.0, %v506
    %508 = vdwg.mxu0
    %509 = vrot.lane.b32.xlu0 %v126, 64
    %v510 = vpop.permute.xlu0 %509
    %v513 = vsel %vm136, %v426, 0
    %515 = vmatpush.msra.mxu0 0.0
    %516 = vmatpush.msra.mxu0 0.0
    %517 = vmatpush.msra.mxu0 0.0
    %518 = vmatpush.msra.mxu0 0.0
    %519 = vmatpush.msra.mxu0 0.0
    %520 = vmatpush.msra.mxu0 0.0
    %521 = vmatpush.msra.mxu0 0.0
    %522 = vmatpush.msra.mxu0 0.0
    %523 = vmatpush.msra.mxu0 0.0
    %524 = vmatpush.msra.mxu0 0.0
    %525 = vmatpush.msra.mxu0 0.0
    %526 = vmatpush.msra.mxu0 0.0
    %527 = vmatpush.msra.mxu0 0.0
    %528 = vmatpush.msra.mxu0 0.0
    %529 = vmatpush.msra.mxu0 0.0
    %530 = vmatpush.msra.mxu0 %v510
    %531 = vmatmul.f32.gmra.mxu0 %v513
    %v532 = vpop.f32.mrf.mxu0
    %v533 = vadd.f32 0.0, %v532
    %534 = vdwg.mxu0
    %535 = vrot.lane.b32.xlu0 %v102, 64
    %v536 = vpop.permute.xlu0 %535
    %v539 = vsel %vm136, %v427, 0
    %541 = vmatpush.msra.mxu0 0.0
    %542 = vmatpush.msra.mxu0 0.0
    %543 = vmatpush.msra.mxu0 0.0
    %544 = vmatpush.msra.mxu0 0.0
    %545 = vmatpush.msra.mxu0 0.0
    %546 = vmatpush.msra.mxu0 0.0
    %547 = vmatpush.msra.mxu0 0.0
    %548 = vmatpush.msra.mxu0 0.0
    %549 = vmatpush.msra.mxu0 0.0
    %550 = vmatpush.msra.mxu0 0.0
    %551 = vmatpush.msra.mxu0 0.0
    %552 = vmatpush.msra.mxu0 0.0
    %553 = vmatpush.msra.mxu0 0.0
    %554 = vmatpush.msra.mxu0 0.0
    %555 = vmatpush.msra.mxu0 0.0
    %556 = vmatpush.msra.mxu0 %v536
    %557 = vmatmul.f32.gmra.mxu0 %v539
    %v558 = vpop.f32.mrf.mxu0
    %v559 = vadd.f32 0.0, %v558
    %560 = vdwg.mxu0
    %561 = vrot.lane.b32.xlu0 %v129, 64
    %v562 = vpop.permute.xlu0 %561
    %v565 = vsel %vm136, %v428, 0
    %567 = vmatpush.msra.mxu0 0.0
    %568 = vmatpush.msra.mxu0 0.0
    %569 = vmatpush.msra.mxu0 0.0
    %570 = vmatpush.msra.mxu0 0.0
    %571 = vmatpush.msra.mxu0 0.0
    %572 = vmatpush.msra.mxu0 0.0
    %573 = vmatpush.msra.mxu0 0.0
    %574 = vmatpush.msra.mxu0 0.0
    %575 = vmatpush.msra.mxu0 0.0
    %576 = vmatpush.msra.mxu0 0.0
    %577 = vmatpush.msra.mxu0 0.0
    %578 = vmatpush.msra.mxu0 0.0
    %579 = vmatpush.msra.mxu0 0.0
    %580 = vmatpush.msra.mxu0 0.0
    %581 = vmatpush.msra.mxu0 0.0
    %582 = vmatpush.msra.mxu0 %v562
    %583 = vmatmul.f32.gmra.mxu0 %v565
    %v584 = vpop.f32.mrf.mxu0
    %v585 = vadd.f32 0.0, %v584
    %586 = vdwg.mxu0
    %587 = vrot.lane.b32.xlu0 %v131, 64
    %v588 = vpop.permute.xlu0 %587
    %v591 = vsel %vm136, %v429, 0
    %593 = vmatpush.msra.mxu0 0.0
    %594 = vmatpush.msra.mxu0 0.0
    %595 = vmatpush.msra.mxu0 0.0
    %596 = vmatpush.msra.mxu0 0.0
    %597 = vmatpush.msra.mxu0 0.0
    %598 = vmatpush.msra.mxu0 0.0
    %599 = vmatpush.msra.mxu0 0.0
    %600 = vmatpush.msra.mxu0 0.0
    %601 = vmatpush.msra.mxu0 0.0
    %602 = vmatpush.msra.mxu0 0.0
    %603 = vmatpush.msra.mxu0 0.0
    %604 = vmatpush.msra.mxu0 0.0
    %605 = vmatpush.msra.mxu0 0.0
    %606 = vmatpush.msra.mxu0 0.0
    %607 = vmatpush.msra.mxu0 0.0
    %608 = vmatpush.msra.mxu0 %v588
    %609 = vmatmul.f32.gmra.mxu0 %v591
    %v610 = vpop.f32.mrf.mxu0
    %v611 = vadd.f32 0.0, %v610
    %612 = vdwg.mxu0
    %613 = vrot.lane.b32.xlu0 %v133, 64
    %v614 = vpop.permute.xlu0 %613
    %v617 = vsel %vm136, %v430, 0
    %619 = vmatpush.msra.mxu0 0.0
    %620 = vmatpush.msra.mxu0 0.0
    %621 = vmatpush.msra.mxu0 0.0
    %622 = vmatpush.msra.mxu0 0.0
    %623 = vmatpush.msra.mxu0 0.0
    %624 = vmatpush.msra.mxu0 0.0
    %625 = vmatpush.msra.mxu0 0.0
    %626 = vmatpush.msra.mxu0 0.0
    %627 = vmatpush.msra.mxu0 0.0
    %628 = vmatpush.msra.mxu0 0.0
    %629 = vmatpush.msra.mxu0 0.0
    %630 = vmatpush.msra.mxu0 0.0
    %631 = vmatpush.msra.mxu0 0.0
    %632 = vmatpush.msra.mxu0 0.0
    %633 = vmatpush.msra.mxu0 0.0
    %634 = vmatpush.msra.mxu0 %v614
    %635 = vmatmul.f32.gmra.mxu0 %v617
    %v636 = vpop.f32.mrf.mxu0
    %v637 = vadd.f32 0.0, %v636
    %638 = vdwg.mxu0
    %640 = vrot.lane.b32.xlu0 %v481, 8
    %v641 = vpop.permute.xlu0 %640
    %644 = vrot.lane.b32.xlu0 %v507, 16
    %v645 = vpop.permute.xlu0 %644
    %648 = vrot.lane.b32.xlu0 %v533, 24
    %v649 = vpop.permute.xlu0 %648
    %v651 = vsel %vm136, %v455, %v641
    %vm652 = vcmask 130048
    %v653 = vsel %vm652, %v651, %v645
    %vm654 = vcmask 195584
    %v655 = vsel %vm654, %v653, %v649
    %657 = vrot.lane.b32.xlu0 %v585, 8
    %v658 = vpop.permute.xlu0 %657
    %661 = vrot.lane.b32.xlu0 %v611, 16
    %v662 = vpop.permute.xlu0 %661
    %665 = vrot.lane.b32.xlu0 %v637, 24
    %v666 = vpop.permute.xlu0 %665
    %v668 = vsel %vm136, %v559, %v658
    %v669 = vsel %vm652, %v668, %v662
    %v670 = vsel %vm654, %v669, %v666
    %v671 = vperm.slane %v70, 0
    %v673 = vsel %vm74, %v655, 0
    %v676 = vsel %vm74, %v670, 0
    %678 = vmatpush.msra.mxu0 0.0
    %679 = vmatpush.msra.mxu0 0.0
    %680 = vmatpush.msra.mxu0 0.0
    %681 = vmatpush.msra.mxu0 0.0
    %682 = vmatpush.msra.mxu0 0.0
    %683 = vmatpush.msra.mxu0 0.0
    %684 = vmatpush.msra.mxu0 0.0
    %685 = vmatpush.msra.mxu0 0.0
    %686 = vmatpush.msra.mxu0 0.0
    %687 = vmatpush.msra.mxu0 0.0
    %688 = vmatpush.msra.mxu0 0.0
    %689 = vmatpush.msra.mxu0 0.0
    %690 = vmatpush.msra.mxu0 %v56
    %691 = vmatpush.msra.mxu0 %v55
    %692 = vmatpush.msra.mxu0 %v54
    %693 = vmatpush.msra.mxu0 %v53
    %694 = vmatmul.f32.gmra.mxu0 %v673
    %v695 = vpop.f32.mrf.mxu0
    %v696 = vadd.f32 %v671, %v695
    %697 = vmatmul.f32.gmra.mxu0 %v676
    %v698 = vpop.f32.mrf.mxu0
    %v699 = vadd.f32 %v671, %v698
    %700 = vdwg.mxu0
    %v701 = vadd.f32 %v45, %v696
    %v702 = vadd.f32 %v47, %v699
    %v703 = vsel %vm74, %v701, 0.0
    %704 = vadd.xlane.f32.xlu0 %v703
    %v705 = vpop.xlane.xlu0 %704
    %v706 = vsel %vm74, %v702, 0.0
    %707 = vadd.xlane.f32.xlu0 %v706
    %v708 = vpop.xlane.xlu0 %707
    %v709 = vrcp.pop 32.0
    %v710 = vmul.f32 32.0, %v709
    %v711 = vsub.f32 1.0, %v710
    %v712 = vmul.f32 %v709, %v711
    %v713 = vadd.f32 %v709, %v712
    %vm714 = vweird.f32 %v709
    %v715 = vsel %vm714, %v709, %v713
    %v716 = vmul.f32 %v705, %v715
    %v717 = vmul.f32 %v708, %v715
    %v718 = vsub.f32 %v701, %v716
    %v719 = vsub.f32 %v702, %v717
    %v720 = vmul.f32 %v718, %v718
    %v721 = vmul.f32 %v719, %v719
    %v722 = vsel %vm74, %v720, 0.0
    %723 = vadd.xlane.f32.xlu0 %v722
    %v724 = vpop.xlane.xlu0 %723
    %v725 = vsel %vm74, %v721, 0.0
    %726 = vadd.xlane.f32.xlu0 %v725
    %v727 = vpop.xlane.xlu0 %726
    %v728 = vmul.f32 %v724, %v715
    %v729 = vmul.f32 %v727, %v715
    %v730 = vadd.f32 %v728, 1e-05
    %v731 = vadd.f32 %v729, 1e-05
    %v732 = vrsqrt.pop %v730
    %v733 = vmul.f32 %v732, %v730
    %v734 = vmul.f32 %v733, %v732
    %v735 = vmul.f32 0.5, %v734
    %v736 = vsub.f32 1.5, %v735
    %v737 = vmul.f32 %v732, %v736
    %vm738 = vweird.f32 %v730
    %vm739 = vweird.f32 %v732
    %vm740 = vmor %vm738, %vm739
    %v741 = vsel %vm740, %v732, %v737
    %v742 = vrsqrt.pop %v731
    %v743 = vmul.f32 %v742, %v731
    %v744 = vmul.f32 %v743, %v742
    %v745 = vmul.f32 0.5, %v744
    %v746 = vsub.f32 1.5, %v745
    %v747 = vmul.f32 %v742, %v746
    %vm748 = vweird.f32 %v731
    %vm749 = vweird.f32 %v742
    %vm750 = vmor %vm748, %vm749
    %v751 = vsel %vm750, %v742, %v747
    %v752 = vmul.f32 %v718, %v741
    %v753 = vmul.f32 %v719, %v751
    %v754 = vperm.slane %v70, 1
    %v755 = vmul.f32 %v752, %v754
    %v756 = vmul.f32 %v753, %v754
    %v757 = vperm.slane %v70, 2
    %v758 = vadd.f32 %v755, %v757
    %v759 = vadd.f32 %v756, %v757
    %v761 = vperm.slane %v61, 0
    %v764 = vsel %vm74, %v758, 0
    %v767 = vsel %vm74, %v759, 0
    %769 = vmatpush.msra.mxu0 0.0
    %770 = vmatpush.msra.mxu0 0.0
    %771 = vmatpush.msra.mxu0 0.0
    %772 = vmatpush.msra.mxu0 0.0
    %773 = vmatpush.msra.mxu0 0.0
    %774 = vmatpush.msra.mxu0 0.0
    %775 = vmatpush.msra.mxu0 0.0
    %776 = vmatpush.msra.mxu0 0.0
    %777 = vmatpush.msra.mxu0 0.0
    %778 = vmatpush.msra.mxu0 0.0
    %779 = vmatpush.msra.mxu0 0.0
    %780 = vmatpush.msra.mxu0 0.0
    %781 = vmatpush.msra.mxu0 %v60
    %782 = vmatpush.msra.mxu0 %v59
    %783 = vmatpush.msra.mxu0 %v58
    %784 = vmatpush.msra.mxu0 %v57
    %785 = vmatmul.f32.gmra.mxu0 %v764
    %v786 = vpop.f32.mrf.mxu0
    %v787 = vadd.f32 %v761, %v786
    %788 = vmatmul.f32.gmra.mxu0 %v767
    %v789 = vpop.f32.mrf.mxu0
    %v790 = vadd.f32 %v761, %v789
    %791 = vdwg.mxu0
    %v792 = vmax.f32 %v787, 0.0
    %v793 = vmax.f32 %v790, 0.0
    %v794 = vperm.slane %v70, 3
    %vm795 = vcmask 523264
    %v797 = vsel %vm795, %v792, 0
    %v800 = vsel %vm795, %v793, 0
    %802 = vmatpush.msra.mxu0 0.0
    %803 = vmatpush.msra.mxu0 0.0
    %804 = vmatpush.msra.mxu0 0.0
    %805 = vmatpush.msra.mxu0 0.0
    %806 = vmatpush.msra.mxu0 0.0
    %807 = vmatpush.msra.mxu0 0.0
    %808 = vmatpush.msra.mxu0 0.0
    %809 = vmatpush.msra.mxu0 0.0
    %810 = vmatpush.msra.mxu0 %v69
    %811 = vmatpush.msra.mxu0 %v68
    %812 = vmatpush.msra.mxu0 %v67
    %813 = vmatpush.msra.mxu0 %v66
    %814 = vmatpush.msra.mxu0 %v65
    %815 = vmatpush.msra.mxu0 %v64
    %816 = vmatpush.msra.mxu0 %v63
    %817 = vmatpush.msra.mxu0 %v62
    %818 = vmatmul.f32.gmra.mxu0 %v797
    %v819 = vpop.f32.mrf.mxu0
    %v820 = vadd.f32 %v794, %v819
    %821 = vmatmul.f32.gmra.mxu0 %v800
    %v822 = vpop.f32.mrf.mxu0
    %v823 = vadd.f32 %v794, %v822
    %824 = vdwg.mxu0
    %v825 = vadd.f32 %v758, %v820
    %v826 = vadd.f32 %v759, %v823
    %v827 = vsel %vm74, %v825, 0.0
    %828 = vadd.xlane.f32.xlu0 %v827
    %v829 = vpop.xlane.xlu0 %828
    %v830 = vsel %vm74, %v826, 0.0
    %831 = vadd.xlane.f32.xlu0 %v830
    %v832 = vpop.xlane.xlu0 %831
    %v833 = vmul.f32 %v829, %v715
    %v834 = vmul.f32 %v832, %v715
    %v835 = vsub.f32 %v825, %v833
    %v836 = vsub.f32 %v826, %v834
    %v837 = vmul.f32 %v835, %v835
    %v838 = vmul.f32 %v836, %v836
    %v839 = vsel %vm74, %v837, 0.0
    %840 = vadd.xlane.f32.xlu0 %v839
    %v841 = vpop.xlane.xlu0 %840
    %v842 = vsel %vm74, %v838, 0.0
    %843 = vadd.xlane.f32.xlu0 %v842
    %v844 = vpop.xlane.xlu0 %843
    %v845 = vmul.f32 %v841, %v715
    %v846 = vmul.f32 %v844, %v715
    %v847 = vadd.f32 %v845, 1e-05
    %v848 = vadd.f32 %v846, 1e-05
    %v849 = vrsqrt.pop %v847
    %v850 = vmul.f32 %v849, %v847
    %v851 = vmul.f32 %v850, %v849
    %v852 = vmul.f32 0.5, %v851
    %v853 = vsub.f32 1.5, %v852
    %v854 = vmul.f32 %v849, %v853
    %vm855 = vweird.f32 %v847
    %vm856 = vweird.f32 %v849
    %vm857 = vmor %vm855, %vm856
    %v858 = vsel %vm857, %v849, %v854
    %v859 = vrsqrt.pop %v848
    %v860 = vmul.f32 %v859, %v848
    %v861 = vmul.f32 %v860, %v859
    %v862 = vmul.f32 0.5, %v861
    %v863 = vsub.f32 1.5, %v862
    %v864 = vmul.f32 %v859, %v863
    %vm865 = vweird.f32 %v848
    %vm866 = vweird.f32 %v859
    %vm867 = vmor %vm865, %vm866
    %v868 = vsel %vm867, %v859, %v864
    %v869 = vmul.f32 %v835, %v858
    %v870 = vmul.f32 %v836, %v868
    %v871 = vperm.slane %v70, 4
    %v872 = vmul.f32 %v869, %v871
    %v873 = vmul.f32 %v870, %v871
    %v874 = vperm.slane %v70, 5
    %v875 = vadd.f32 %v872, %v874
    %v876 = vadd.f32 %v873, %v874
    %s877 = scalar_lea.vmem %s1, 32
    %v878 = vld [vmem:[%s877] sm:$0xff]
    %v879 = vld [vmem:[%s877 + $0x8] sm:$0xff]
    %v880 = vld [vmem:[%s877 + $0x10] sm:$0xff]
    %v881 = vld [vmem:[%s877 + $0x18] sm:$0xff]
    %s882 = scalar_lea.vmem %s2, 1
    %v883 = vld [vmem:[%s882] sm:$0x1]
    %s884 = scalar_lea.vmem %s3, 32
    %v885 = vld [vmem:[%s884] sm:$0xff]
    %v886 = vld [vmem:[%s884 + $0x8] sm:$0xff]
    %v887 = vld [vmem:[%s884 + $0x10] sm:$0xff]
    %v888 = vld [vmem:[%s884 + $0x18] sm:$0xff]
    %s889 = scalar_lea.vmem %s5, 32
    %v890 = vld [vmem:[%s889] sm:$0xff]
    %v891 = vld [vmem:[%s889 + $0x8] sm:$0xff]
    %v892 = vld [vmem:[%s889 + $0x10] sm:$0xff]
    %v893 = vld [vmem:[%s889 + $0x18] sm:$0xff]
    %s894 = scalar_lea.vmem [#allocation2], 1
    %v895 = vld [vmem:[%s894] sm:$0x1]
    %s896 = scalar_lea.vmem %s7, 64
    %v897 = vld [vmem:[%s896] sm:$0xff]
    %v898 = vld [vmem:[%s896 + $0x8] sm:$0xff]
    %v899 = vld [vmem:[%s896 + $0x10] sm:$0xff]
    %v900 = vld [vmem:[%s896 + $0x18] sm:$0xff]
    %v901 = vld [vmem:[%s896 + $0x20] sm:$0xff]
    %v902 = vld [vmem:[%s896 + $0x28] sm:$0xff]
    %v903 = vld [vmem:[%s896 + $0x30] sm:$0xff]
    %v904 = vld [vmem:[%s896 + $0x38] sm:$0xff]
    %s905 = scalar_lea.vmem %s4, 8
    %v906 = vld [vmem:[%s905] sm:$0x3f]
    %v908 = vperm.slane %v883, 0
    %v911 = vsel %vm74, %v875, 0
    %v914 = vsel %vm74, %v876, 0
    %916 = vmatpush.msra.mxu0 0.0
    %917 = vmatpush.msra.mxu0 0.0
    %918 = vmatpush.msra.mxu0 0.0
    %919 = vmatpush.msra.mxu0 0.0
    %920 = vmatpush.msra.mxu0 0.0
    %921 = vmatpush.msra.mxu0 0.0
    %922 = vmatpush.msra.mxu0 0.0
    %923 = vmatpush.msra.mxu0 0.0
    %924 = vmatpush.msra.mxu0 0.0
    %925 = vmatpush.msra.mxu0 0.0
    %926 = vmatpush.msra.mxu0 0.0
    %927 = vmatpush.msra.mxu0 0.0
    %928 = vmatpush.msra.mxu0 %v881
    %929 = vmatpush.msra.mxu0 %v880
    %930 = vmatpush.msra.mxu0 %v879
    %931 = vmatpush.msra.mxu0 %v878
    %932 = vmatmul.f32.gmra.mxu0 %v911
    %v933 = vpop.f32.mrf.mxu0
    %v934 = vadd.f32 %v908, %v933
    %935 = vmatmul.f32.gmra.mxu0 %v914
    %v936 = vpop.f32.mrf.mxu0
    %v937 = vadd.f32 %v908, %v936
    %938 = vdwg.mxu0
    %v939 = vmul.f32 %v934, 0.35355338
    %v940 = vmul.f32 %v937, 0.35355338
    %942 = vrot.lane.b32.xlu0 %v939, 120
    %v943 = vpop.permute.xlu0 %942
    %944 = vrot.lane.b32.xlu0 %v939, 112
    %v945 = vpop.permute.xlu0 %944
    %946 = vrot.lane.b32.xlu0 %v939, 104
    %v947 = vpop.permute.xlu0 %946
    %949 = vrot.lane.b32.xlu0 %v940, 120
    %v950 = vpop.permute.xlu0 %949
    %951 = vrot.lane.b32.xlu0 %v940, 112
    %v952 = vpop.permute.xlu0 %951
    %953 = vrot.lane.b32.xlu0 %v940, 104
    %v954 = vpop.permute.xlu0 %953
    %956 = vrot.lane.b32.xlu0 %v934, 120
    %v957 = vpop.permute.xlu0 %956
    %958 = vrot.lane.b32.xlu0 %v934, 112
    %v959 = vpop.permute.xlu0 %958
    %960 = vrot.lane.b32.xlu0 %v934, 104
    %v961 = vpop.permute.xlu0 %960
    %963 = vrot.lane.b32.xlu0 %v937, 120
    %v964 = vpop.permute.xlu0 %963
    %965 = vrot.lane.b32.xlu0 %v937, 112
    %v966 = vpop.permute.xlu0 %965
    %967 = vrot.lane.b32.xlu0 %v937, 104
    %v968 = vpop.permute.xlu0 %967
    %969 = vrot.lane.b32.xlu0 %v934, 96
    %v970 = vpop.permute.xlu0 %969
    %v971 = vsel %vm136, %v939, 0
    %v973 = vsel %vm136, %v970, 0
    %975 = vmatpush.xpose.msra.mxu0 0.0
    %976 = vmatpush.xpose.msra.mxu0 0.0
    %977 = vmatpush.xpose.msra.mxu0 0.0
    %978 = vmatpush.xpose.msra.mxu0 0.0
    %979 = vmatpush.xpose.msra.mxu0 0.0
    %980 = vmatpush.xpose.msra.mxu0 0.0
    %981 = vmatpush.xpose.msra.mxu0 0.0
    %982 = vmatpush.xpose.msra.mxu0 0.0
    %983 = vmatpush.xpose.msra.mxu0 0.0
    %984 = vmatpush.xpose.msra.mxu0 0.0
    %985 = vmatpush.xpose.msra.mxu0 0.0
    %986 = vmatpush.xpose.msra.mxu0 0.0
    %987 = vmatpush.xpose.msra.mxu0 0.0
    %988 = vmatpush.xpose.msra.mxu0 0.0
    %989 = vmatpush.xpose.msra.mxu0 0.0
    %990 = vmatpush.xpose.msra.mxu0 %v973
    %991 = vmatmul.f32.gmra.mxu0 %v971
    %v992 = vpop.f32.mrf.mxu0
    %v993 = vadd.f32 0.0, %v992
    %994 = vdwg.mxu0
    %995 = vrot.lane.b32.xlu0 %v957, 96
    %v996 = vpop.permute.xlu0 %995
    %v997 = vsel %vm136, %v943, 0
    %v999 = vsel %vm136, %v996, 0
    %1001 = vmatpush.xpose.msra.mxu0 0.0
    %1002 = vmatpush.xpose.msra.mxu0 0.0
    %1003 = vmatpush.xpose.msra.mxu0 0.0
    %1004 = vmatpush.xpose.msra.mxu0 0.0
    %1005 = vmatpush.xpose.msra.mxu0 0.0
    %1006 = vmatpush.xpose.msra.mxu0 0.0
    %1007 = vmatpush.xpose.msra.mxu0 0.0
    %1008 = vmatpush.xpose.msra.mxu0 0.0
    %1009 = vmatpush.xpose.msra.mxu0 0.0
    %1010 = vmatpush.xpose.msra.mxu0 0.0
    %1011 = vmatpush.xpose.msra.mxu0 0.0
    %1012 = vmatpush.xpose.msra.mxu0 0.0
    %1013 = vmatpush.xpose.msra.mxu0 0.0
    %1014 = vmatpush.xpose.msra.mxu0 0.0
    %1015 = vmatpush.xpose.msra.mxu0 0.0
    %1016 = vmatpush.xpose.msra.mxu0 %v999
    %1017 = vmatmul.f32.gmra.mxu0 %v997
    %v1018 = vpop.f32.mrf.mxu0
    %v1019 = vadd.f32 0.0, %v1018
    %1020 = vdwg.mxu0
    %1021 = vrot.lane.b32.xlu0 %v959, 96
    %v1022 = vpop.permute.xlu0 %1021
    %v1023 = vsel %vm136, %v945, 0
    %v1025 = vsel %vm136, %v1022, 0
    %1027 = vmatpush.xpose.msra.mxu0 0.0
    %1028 = vmatpush.xpose.msra.mxu0 0.0
    %1029 = vmatpush.xpose.msra.mxu0 0.0
    %1030 = vmatpush.xpose.msra.mxu0 0.0
    %1031 = vmatpush.xpose.msra.mxu0 0.0
    %1032 = vmatpush.xpose.msra.mxu0 0.0
    %1033 = vmatpush.xpose.msra.mxu0 0.0
    %1034 = vmatpush.xpose.msra.mxu0 0.0
    %1035 = vmatpush.xpose.msra.mxu0 0.0
    %1036 = vmatpush.xpose.msra.mxu0 0.0
    %1037 = vmatpush.xpose.msra.mxu0 0.0
    %1038 = vmatpush.xpose.msra.mxu0 0.0
    %1039 = vmatpush.xpose.msra.mxu0 0.0
    %1040 = vmatpush.xpose.msra.mxu0 0.0
    %1041 = vmatpush.xpose.msra.mxu0 0.0
    %1042 = vmatpush.xpose.msra.mxu0 %v1025
    %1043 = vmatmul.f32.gmra.mxu0 %v1023
    %v1044 = vpop.f32.mrf.mxu0
    %v1045 = vadd.f32 0.0, %v1044
    %1046 = vdwg.mxu0
    %1047 = vrot.lane.b32.xlu0 %v961, 96
    %v1048 = vpop.permute.xlu0 %1047
    %v1049 = vsel %vm136, %v947, 0
    %v1051 = vsel %vm136, %v1048, 0
    %1053 = vmatpush.xpose.msra.mxu0 0.0
    %1054 = vmatpush.xpose.msra.mxu0 0.0
    %1055 = vmatpush.xpose.msra.mxu0 0.0
    %1056 = vmatpush.xpose.msra.mxu0 0.0
    %1057 = vmatpush.xpose.msra.mxu0 0.0
    %1058 = vmatpush.xpose.msra.mxu0 0.0
    %1059 = vmatpush.xpose.msra.mxu0 0.0
    %1060 = vmatpush.xpose.msra.mxu0 0.0
    %1061 = vmatpush.xpose.msra.mxu0 0.0
    %1062 = vmatpush.xpose.msra.mxu0 0.0
    %1063 = vmatpush.xpose.msra.mxu0 0.0
    %1064 = vmatpush.xpose.msra.mxu0 0.0
    %1065 = vmatpush.xpose.msra.mxu0 0.0
    %1066 = vmatpush.xpose.msra.mxu0 0.0
    %1067 = vmatpush.xpose.msra.mxu0 0.0
    %1068 = vmatpush.xpose.msra.mxu0 %v1051
    %1069 = vmatmul.f32.gmra.mxu0 %v1049
    %v1070 = vpop.f32.mrf.mxu0
    %v1071 = vadd.f32 0.0, %v1070
    %1072 = vdwg.mxu0
    %1073 = vrot.lane.b32.xlu0 %v937, 96
    %v1074 = vpop.permute.xlu0 %1073
    %v1075 = vsel %vm136, %v940, 0
    %v1077 = vsel %vm136, %v1074, 0
    %1079 = vmatpush.xpose.msra.mxu0 0.0
    %1080 = vmatpush.xpose.msra.mxu0 0.0
    %1081 = vmatpush.xpose.msra.mxu0 0.0
    %1082 = vmatpush.xpose.msra.mxu0 0.0
    %1083 = vmatpush.xpose.msra.mxu0 0.0
    %1084 = vmatpush.xpose.msra.mxu0 0.0
    %1085 = vmatpush.xpose.msra.mxu0 0.0
    %1086 = vmatpush.xpose.msra.mxu0 0.0
    %1087 = vmatpush.xpose.msra.mxu0 0.0
    %1088 = vmatpush.xpose.msra.mxu0 0.0
    %1089 = vmatpush.xpose.msra.mxu0 0.0
    %1090 = vmatpush.xpose.msra.mxu0 0.0
    %1091 = vmatpush.xpose.msra.mxu0 0.0
    %1092 = vmatpush.xpose.msra.mxu0 0.0
    %1093 = vmatpush.xpose.msra.mxu0 0.0
    %1094 = vmatpush.xpose.msra.mxu0 %v1077
    %1095 = vmatmul.f32.gmra.mxu0 %v1075
    %v1096 = vpop.f32.mrf.mxu0
    %v1097 = vadd.f32 0.0, %v1096
    %1098 = vdwg.mxu0
    %1099 = vrot.lane.b32.xlu0 %v964, 96
    %v1100 = vpop.permute.xlu0 %1099
    %v1101 = vsel %vm136, %v950, 0
    %v1103 = vsel %vm136, %v1100, 0
    %1105 = vmatpush.xpose.msra.mxu0 0.0
    %1106 = vmatpush.xpose.msra.mxu0 0.0
    %1107 = vmatpush.xpose.msra.mxu0 0.0
    %1108 = vmatpush.xpose.msra.mxu0 0.0
    %1109 = vmatpush.xpose.msra.mxu0 0.0
    %1110 = vmatpush.xpose.msra.mxu0 0.0
    %1111 = vmatpush.xpose.msra.mxu0 0.0
    %1112 = vmatpush.xpose.msra.mxu0 0.0
    %1113 = vmatpush.xpose.msra.mxu0 0.0
    %1114 = vmatpush.xpose.msra.mxu0 0.0
    %1115 = vmatpush.xpose.msra.mxu0 0.0
    %1116 = vmatpush.xpose.msra.mxu0 0.0
    %1117 = vmatpush.xpose.msra.mxu0 0.0
    %1118 = vmatpush.xpose.msra.mxu0 0.0
    %1119 = vmatpush.xpose.msra.mxu0 0.0
    %1120 = vmatpush.xpose.msra.mxu0 %v1103
    %1121 = vmatmul.f32.gmra.mxu0 %v1101
    %v1122 = vpop.f32.mrf.mxu0
    %v1123 = vadd.f32 0.0, %v1122
    %1124 = vdwg.mxu0
    %1125 = vrot.lane.b32.xlu0 %v966, 96
    %v1126 = vpop.permute.xlu0 %1125
    %v1127 = vsel %vm136, %v952, 0
    %v1129 = vsel %vm136, %v1126, 0
    %1131 = vmatpush.xpose.msra.mxu0 0.0
    %1132 = vmatpush.xpose.msra.mxu0 0.0
    %1133 = vmatpush.xpose.msra.mxu0 0.0
    %1134 = vmatpush.xpose.msra.mxu0 0.0
    %1135 = vmatpush.xpose.msra.mxu0 0.0
    %1136 = vmatpush.xpose.msra.mxu0 0.0
    %1137 = vmatpush.xpose.msra.mxu0 0.0
    %1138 = vmatpush.xpose.msra.mxu0 0.0
    %1139 = vmatpush.xpose.msra.mxu0 0.0
    %1140 = vmatpush.xpose.msra.mxu0 0.0
    %1141 = vmatpush.xpose.msra.mxu0 0.0
    %1142 = vmatpush.xpose.msra.mxu0 0.0
    %1143 = vmatpush.xpose.msra.mxu0 0.0
    %1144 = vmatpush.xpose.msra.mxu0 0.0
    %1145 = vmatpush.xpose.msra.mxu0 0.0
    %1146 = vmatpush.xpose.msra.mxu0 %v1129
    %1147 = vmatmul.f32.gmra.mxu0 %v1127
    %v1148 = vpop.f32.mrf.mxu0
    %v1149 = vadd.f32 0.0, %v1148
    %1150 = vdwg.mxu0
    %1151 = vrot.lane.b32.xlu0 %v968, 96
    %v1152 = vpop.permute.xlu0 %1151
    %v1153 = vsel %vm136, %v954, 0
    %v1155 = vsel %vm136, %v1152, 0
    %1157 = vmatpush.xpose.msra.mxu0 0.0
    %1158 = vmatpush.xpose.msra.mxu0 0.0
    %1159 = vmatpush.xpose.msra.mxu0 0.0
    %1160 = vmatpush.xpose.msra.mxu0 0.0
    %1161 = vmatpush.xpose.msra.mxu0 0.0
    %1162 = vmatpush.xpose.msra.mxu0 0.0
    %1163 = vmatpush.xpose.msra.mxu0 0.0
    %1164 = vmatpush.xpose.msra.mxu0 0.0
    %1165 = vmatpush.xpose.msra.mxu0 0.0
    %1166 = vmatpush.xpose.msra.mxu0 0.0
    %1167 = vmatpush.xpose.msra.mxu0 0.0
    %1168 = vmatpush.xpose.msra.mxu0 0.0
    %1169 = vmatpush.xpose.msra.mxu0 0.0
    %1170 = vmatpush.xpose.msra.mxu0 0.0
    %1171 = vmatpush.xpose.msra.mxu0 0.0
    %1172 = vmatpush.xpose.msra.mxu0 %v1155
    %1173 = vmatmul.f32.gmra.mxu0 %v1153
    %v1174 = vpop.f32.mrf.mxu0
    %v1175 = vadd.f32 0.0, %v1174
    %1176 = vdwg.mxu0
    %v1177 = vsel %vm136, %v993, -inf
    %1178 = vmax.xlane.f32.xlu0 %v1177
    %v1179 = vpop.xlane.xlu0 %1178
    %v1180 = vsel %vm136, %v1019, -inf
    %1181 = vmax.xlane.f32.xlu0 %v1180
    %v1182 = vpop.xlane.xlu0 %1181
    %v1183 = vsel %vm136, %v1045, -inf
    %1184 = vmax.xlane.f32.xlu0 %v1183
    %v1185 = vpop.xlane.xlu0 %1184
    %v1186 = vsel %vm136, %v1071, -inf
    %1187 = vmax.xlane.f32.xlu0 %v1186
    %v1188 = vpop.xlane.xlu0 %1187
    %v1189 = vsel %vm136, %v1097, -inf
    %1190 = vmax.xlane.f32.xlu0 %v1189
    %v1191 = vpop.xlane.xlu0 %1190
    %v1192 = vsel %vm136, %v1123, -inf
    %1193 = vmax.xlane.f32.xlu0 %v1192
    %v1194 = vpop.xlane.xlu0 %1193
    %v1195 = vsel %vm136, %v1149, -inf
    %1196 = vmax.xlane.f32.xlu0 %v1195
    %v1197 = vpop.xlane.xlu0 %1196
    %v1198 = vsel %vm136, %v1175, -inf
    %1199 = vmax.xlane.f32.xlu0 %v1198
    %v1200 = vpop.xlane.xlu0 %1199
    %v1201 = vsub.f32 %v993, %v1179
    %v1202 = vsub.f32 %v1019, %v1182
    %v1203 = vsub.f32 %v1045, %v1185
    %v1204 = vsub.f32 %v1071, %v1188
    %v1205 = vsub.f32 %v1097, %v1191
    %v1206 = vsub.f32 %v1123, %v1194
    %v1207 = vsub.f32 %v1149, %v1197
    %v1208 = vsub.f32 %v1175, %v1200
    %v1209 = vmul.f32 %v1201, 1.442695
    %v1210 = vpow.pop %v1209
    %v1211 = vmul.f32 %v1202, 1.442695
    %v1212 = vpow.pop %v1211
    %v1213 = vmul.f32 %v1203, 1.442695
    %v1214 = vpow.pop %v1213
    %v1215 = vmul.f32 %v1204, 1.442695
    %v1216 = vpow.pop %v1215
    %v1217 = vmul.f32 %v1205, 1.442695
    %v1218 = vpow.pop %v1217
    %v1219 = vmul.f32 %v1206, 1.442695
    %v1220 = vpow.pop %v1219
    %v1221 = vmul.f32 %v1207, 1.442695
    %v1222 = vpow.pop %v1221
    %v1223 = vmul.f32 %v1208, 1.442695
    %v1224 = vpow.pop %v1223
    %v1225 = vsel %vm136, %v1210, 0.0
    %1226 = vadd.xlane.f32.xlu0 %v1225
    %v1227 = vpop.xlane.xlu0 %1226
    %v1228 = vsel %vm136, %v1212, 0.0
    %1229 = vadd.xlane.f32.xlu0 %v1228
    %v1230 = vpop.xlane.xlu0 %1229
    %v1231 = vsel %vm136, %v1214, 0.0
    %1232 = vadd.xlane.f32.xlu0 %v1231
    %v1233 = vpop.xlane.xlu0 %1232
    %v1234 = vsel %vm136, %v1216, 0.0
    %1235 = vadd.xlane.f32.xlu0 %v1234
    %v1236 = vpop.xlane.xlu0 %1235
    %v1237 = vsel %vm136, %v1218, 0.0
    %1238 = vadd.xlane.f32.xlu0 %v1237
    %v1239 = vpop.xlane.xlu0 %1238
    %v1240 = vsel %vm136, %v1220, 0.0
    %1241 = vadd.xlane.f32.xlu0 %v1240
    %v1242 = vpop.xlane.xlu0 %1241
    %v1243 = vsel %vm136, %v1222, 0.0
    %1244 = vadd.xlane.f32.xlu0 %v1243
    %v1245 = vpop.xlane.xlu0 %1244
    %v1246 = vsel %vm136, %v1224, 0.0
    %1247 = vadd.xlane.f32.xlu0 %v1246
    %v1248 = vpop.xlane.xlu0 %1247
    %v1249 = vrcp.pop %v1227
    %v1250 = vrcp.pop %v1230
    %v1251 = vrcp.pop %v1233
    %v1252 = vrcp.pop %v1236
    %v1253 = vrcp.pop %v1239
    %v1254 = vrcp.pop %v1242
    %v1255 = vrcp.pop %v1245
    %v1256 = vrcp.pop %v1248
    %v1257 = vmul.f32 %v1210, %v1249
    %v1258 = vmul.f32 %v1212, %v1250
    %v1259 = vmul.f32 %v1214, %v1251
    %v1260 = vmul.f32 %v1216, %v1252
    %v1261 = vmul.f32 %v1218, %v1253
    %v1262 = vmul.f32 %v1220, %v1254
    %v1263 = vmul.f32 %v1222, %v1255
    %v1264 = vmul.f32 %v1224, %v1256
    %1265 = vrot.lane.b32.xlu0 %v934, 64
    %v1266 = vpop.permute.xlu0 %1265
    %v1269 = vsel %vm136, %v1257, 0
    %1271 = vmatpush.msra.mxu0 0.0
    %1272 = vmatpush.msra.mxu0 0.0
    %1273 = vmatpush.msra.mxu0 0.0
    %1274 = vmatpush.msra.mxu0 0.0
    %1275 = vmatpush.msra.mxu0 0.0
    %1276 = vmatpush.msra.mxu0 0.0
    %1277 = vmatpush.msra.mxu0 0.0
    %1278 = vmatpush.msra.mxu0 0.0
    %1279 = vmatpush.msra.mxu0 0.0
    %1280 = vmatpush.msra.mxu0 0.0
    %1281 = vmatpush.msra.mxu0 0.0
    %1282 = vmatpush.msra.mxu0 0.0
    %1283 = vmatpush.msra.mxu0 0.0
    %1284 = vmatpush.msra.mxu0 0.0
    %1285 = vmatpush.msra.mxu0 0.0
    %1286 = vmatpush.msra.mxu0 %v1266
    %1287 = vmatmul.f32.gmra.mxu0 %v1269
    %v1288 = vpop.f32.mrf.mxu0
    %v1289 = vadd.f32 0.0, %v1288
    %1290 = vdwg.mxu0
    %1291 = vrot.lane.b32.xlu0 %v957, 64
    %v1292 = vpop.permute.xlu0 %1291
    %v1295 = vsel %vm136, %v1258, 0
    %1297 = vmatpush.msra.mxu0 0.0
    %1298 = vmatpush.msra.mxu0 0.0
    %1299 = vmatpush.msra.mxu0 0.0
    %1300 = vmatpush.msra.mxu0 0.0
    %1301 = vmatpush.msra.mxu0 0.0
    %1302 = vmatpush.msra.mxu0 0.0
    %1303 = vmatpush.msra.mxu0 0.0
    %1304 = vmatpush.msra.mxu0 0.0
    %1305 = vmatpush.msra.mxu0 0.0
    %1306 = vmatpush.msra.mxu0 0.0
    %1307 = vmatpush.msra.mxu0 0.0
    %1308 = vmatpush.msra.mxu0 0.0
    %1309 = vmatpush.msra.mxu0 0.0
    %1310 = vmatpush.msra.mxu0 0.0
    %1311 = vmatpush.msra.mxu0 0.0
    %1312 = vmatpush.msra.mxu0 %v1292
    %1313 = vmatmul.f32.gmra.mxu0 %v1295
    %v1314 = vpop.f32.mrf.mxu0
    %v1315 = vadd.f32 0.0, %v1314
    %1316 = vdwg.mxu0
    %1317 = vrot.lane.b32.xlu0 %v959, 64
    %v1318 = vpop.permute.xlu0 %1317
    %v1321 = vsel %vm136, %v1259, 0
    %1323 = vmatpush.msra.mxu0 0.0
    %1324 = vmatpush.msra.mxu0 0.0
    %1325 = vmatpush.msra.mxu0 0.0
    %1326 = vmatpush.msra.mxu0 0.0
    %1327 = vmatpush.msra.mxu0 0.0
    %1328 = vmatpush.msra.mxu0 0.0
    %1329 = vmatpush.msra.mxu0 0.0
    %1330 = vmatpush.msra.mxu0 0.0
    %1331 = vmatpush.msra.mxu0 0.0
    %1332 = vmatpush.msra.mxu0 0.0
    %1333 = vmatpush.msra.mxu0 0.0
    %1334 = vmatpush.msra.mxu0 0.0
    %1335 = vmatpush.msra.mxu0 0.0
    %1336 = vmatpush.msra.mxu0 0.0
    %1337 = vmatpush.msra.mxu0 0.0
    %1338 = vmatpush.msra.mxu0 %v1318
    %1339 = vmatmul.f32.gmra.mxu0 %v1321
    %v1340 = vpop.f32.mrf.mxu0
    %v1341 = vadd.f32 0.0, %v1340
    %1342 = vdwg.mxu0
    %1343 = vrot.lane.b32.xlu0 %v961, 64
    %v1344 = vpop.permute.xlu0 %1343
    %v1347 = vsel %vm136, %v1260, 0
    %1349 = vmatpush.msra.mxu0 0.0
    %1350 = vmatpush.msra.mxu0 0.0
    %1351 = vmatpush.msra.mxu0 0.0
    %1352 = vmatpush.msra.mxu0 0.0
    %1353 = vmatpush.msra.mxu0 0.0
    %1354 = vmatpush.msra.mxu0 0.0
    %1355 = vmatpush.msra.mxu0 0.0
    %1356 = vmatpush.msra.mxu0 0.0
    %1357 = vmatpush.msra.mxu0 0.0
    %1358 = vmatpush.msra.mxu0 0.0
    %1359 = vmatpush.msra.mxu0 0.0
    %1360 = vmatpush.msra.mxu0 0.0
    %1361 = vmatpush.msra.mxu0 0.0
    %1362 = vmatpush.msra.mxu0 0.0
    %1363 = vmatpush.msra.mxu0 0.0
    %1364 = vmatpush.msra.mxu0 %v1344
    %1365 = vmatmul.f32.gmra.mxu0 %v1347
    %v1366 = vpop.f32.mrf.mxu0
    %v1367 = vadd.f32 0.0, %v1366
    %1368 = vdwg.mxu0
    %1369 = vrot.lane.b32.xlu0 %v937, 64
    %v1370 = vpop.permute.xlu0 %1369
    %v1373 = vsel %vm136, %v1261, 0
    %1375 = vmatpush.msra.mxu0 0.0
    %1376 = vmatpush.msra.mxu0 0.0
    %1377 = vmatpush.msra.mxu0 0.0
    %1378 = vmatpush.msra.mxu0 0.0
    %1379 = vmatpush.msra.mxu0 0.0
    %1380 = vmatpush.msra.mxu0 0.0
    %1381 = vmatpush.msra.mxu0 0.0
    %1382 = vmatpush.msra.mxu0 0.0
    %1383 = vmatpush.msra.mxu0 0.0
    %1384 = vmatpush.msra.mxu0 0.0
    %1385 = vmatpush.msra.mxu0 0.0
    %1386 = vmatpush.msra.mxu0 0.0
    %1387 = vmatpush.msra.mxu0 0.0
    %1388 = vmatpush.msra.mxu0 0.0
    %1389 = vmatpush.msra.mxu0 0.0
    %1390 = vmatpush.msra.mxu0 %v1370
    %1391 = vmatmul.f32.gmra.mxu0 %v1373
    %v1392 = vpop.f32.mrf.mxu0
    %v1393 = vadd.f32 0.0, %v1392
    %1394 = vdwg.mxu0
    %1395 = vrot.lane.b32.xlu0 %v964, 64
    %v1396 = vpop.permute.xlu0 %1395
    %v1399 = vsel %vm136, %v1262, 0
    %1401 = vmatpush.msra.mxu0 0.0
    %1402 = vmatpush.msra.mxu0 0.0
    %1403 = vmatpush.msra.mxu0 0.0
    %1404 = vmatpush.msra.mxu0 0.0
    %1405 = vmatpush.msra.mxu0 0.0
    %1406 = vmatpush.msra.mxu0 0.0
    %1407 = vmatpush.msra.mxu0 0.0
    %1408 = vmatpush.msra.mxu0 0.0
    %1409 = vmatpush.msra.mxu0 0.0
    %1410 = vmatpush.msra.mxu0 0.0
    %1411 = vmatpush.msra.mxu0 0.0
    %1412 = vmatpush.msra.mxu0 0.0
    %1413 = vmatpush.msra.mxu0 0.0
    %1414 = vmatpush.msra.mxu0 0.0
    %1415 = vmatpush.msra.mxu0 0.0
    %1416 = vmatpush.msra.mxu0 %v1396
    %1417 = vmatmul.f32.gmra.mxu0 %v1399
    %v1418 = vpop.f32.mrf.mxu0
    %v1419 = vadd.f32 0.0, %v1418
    %1420 = vdwg.mxu0
    %1421 = vrot.lane.b32.xlu0 %v966, 64
    %v1422 = vpop.permute.xlu0 %1421
    %v1425 = vsel %vm136, %v1263, 0
    %1427 = vmatpush.msra.mxu0 0.0
    %1428 = vmatpush.msra.mxu0 0.0
    %1429 = vmatpush.msra.mxu0 0.0
    %1430 = vmatpush.msra.mxu0 0.0
    %1431 = vmatpush.msra.mxu0 0.0
    %1432 = vmatpush.msra.mxu0 0.0
    %1433 = vmatpush.msra.mxu0 0.0
    %1434 = vmatpush.msra.mxu0 0.0
    %1435 = vmatpush.msra.mxu0 0.0
    %1436 = vmatpush.msra.mxu0 0.0
    %1437 = vmatpush.msra.mxu0 0.0
    %1438 = vmatpush.msra.mxu0 0.0
    %1439 = vmatpush.msra.mxu0 0.0
    %1440 = vmatpush.msra.mxu0 0.0
    %1441 = vmatpush.msra.mxu0 0.0
    %1442 = vmatpush.msra.mxu0 %v1422
    %1443 = vmatmul.f32.gmra.mxu0 %v1425
    %v1444 = vpop.f32.mrf.mxu0
    %v1445 = vadd.f32 0.0, %v1444
    %1446 = vdwg.mxu0
    %1447 = vrot.lane.b32.xlu0 %v968, 64
    %v1448 = vpop.permute.xlu0 %1447
    %v1451 = vsel %vm136, %v1264, 0
    %1453 = vmatpush.msra.mxu0 0.0
    %1454 = vmatpush.msra.mxu0 0.0
    %1455 = vmatpush.msra.mxu0 0.0
    %1456 = vmatpush.msra.mxu0 0.0
    %1457 = vmatpush.msra.mxu0 0.0
    %1458 = vmatpush.msra.mxu0 0.0
    %1459 = vmatpush.msra.mxu0 0.0
    %1460 = vmatpush.msra.mxu0 0.0
    %1461 = vmatpush.msra.mxu0 0.0
    %1462 = vmatpush.msra.mxu0 0.0
    %1463 = vmatpush.msra.mxu0 0.0
    %1464 = vmatpush.msra.mxu0 0.0
    %1465 = vmatpush.msra.mxu0 0.0
    %1466 = vmatpush.msra.mxu0 0.0
    %1467 = vmatpush.msra.mxu0 0.0
    %1468 = vmatpush.msra.mxu0 %v1448
    %1469 = vmatmul.f32.gmra.mxu0 %v1451
    %v1470 = vpop.f32.mrf.mxu0
    %v1471 = vadd.f32 0.0, %v1470
    %1472 = vdwg.mxu0
    %1474 = vrot.lane.b32.xlu0 %v1315, 8
    %v1475 = vpop.permute.xlu0 %1474
    %1478 = vrot.lane.b32.xlu0 %v1341, 16
    %v1479 = vpop.permute.xlu0 %1478
    %1482 = vrot.lane.b32.xlu0 %v1367, 24
    %v1483 = vpop.permute.xlu0 %1482
    %v1485 = vsel %vm136, %v1289, %v1475
    %v1486 = vsel %vm652, %v1485, %v1479
    %v1487 = vsel %vm654, %v1486, %v1483
    %1489 = vrot.lane.b32.xlu0 %v1419, 8
    %v1490 = vpop.permute.xlu0 %1489
    %1493 = vrot.lane.b32.xlu0 %v1445, 16
    %v1494 = vpop.permute.xlu0 %1493
    %1497 = vrot.lane.b32.xlu0 %v1471, 24
    %v1498 = vpop.permute.xlu0 %1497
    %v1500 = vsel %vm136, %v1393, %v1490
    %v1501 = vsel %vm652, %v1500, %v1494
    %v1502 = vsel %vm654, %v1501, %v1498
    %v1503 = vperm.slane %v906, 0
    %v1505 = vsel %vm74, %v1487, 0
    %v1508 = vsel %vm74, %v1502, 0
    %1510 = vmatpush.msra.mxu0 0.0
    %1511 = vmatpush.msra.mxu0 0.0
    %1512 = vmatpush.msra.mxu0 0.0
    %1513 = vmatpush.msra.mxu0 0.0
    %1514 = vmatpush.msra.mxu0 0.0
    %1515 = vmatpush.msra.mxu0 0.0
    %1516 = vmatpush.msra.mxu0 0.0
    %1517 = vmatpush.msra.mxu0 0.0
    %1518 = vmatpush.msra.mxu0 0.0
    %1519 = vmatpush.msra.mxu0 0.0
    %1520 = vmatpush.msra.mxu0 0.0
    %1521 = vmatpush.msra.mxu0 0.0
    %1522 = vmatpush.msra.mxu0 %v888
    %1523 = vmatpush.msra.mxu0 %v887
    %1524 = vmatpush.msra.mxu0 %v886
    %1525 = vmatpush.msra.mxu0 %v885
    %1526 = vmatmul.f32.gmra.mxu0 %v1505
    %v1527 = vpop.f32.mrf.mxu0
    %v1528 = vadd.f32 %v1503, %v1527
    %1529 = vmatmul.f32.gmra.mxu0 %v1508
    %v1530 = vpop.f32.mrf.mxu0
    %v1531 = vadd.f32 %v1503, %v1530
    %1532 = vdwg.mxu0
    %v1533 = vadd.f32 %v875, %v1528
    %v1534 = vadd.f32 %v876, %v1531
    %v1535 = vsel %vm74, %v1533, 0.0
    %1536 = vadd.xlane.f32.xlu0 %v1535
    %v1537 = vpop.xlane.xlu0 %1536
    %v1538 = vsel %vm74, %v1534, 0.0
    %1539 = vadd.xlane.f32.xlu0 %v1538
    %v1540 = vpop.xlane.xlu0 %1539
    %v1541 = vmul.f32 %v1537, %v715
    %v1542 = vmul.f32 %v1540, %v715
    %v1543 = vsub.f32 %v1533, %v1541
    %v1544 = vsub.f32 %v1534, %v1542
    %v1545 = vmul.f32 %v1543, %v1543
    %v1546 = vmul.f32 %v1544, %v1544
    %v1547 = vsel %vm74, %v1545, 0.0
    %1548 = vadd.xlane.f32.xlu0 %v1547
    %v1549 = vpop.xlane.xlu0 %1548
    %v1550 = vsel %vm74, %v1546, 0.0
    %1551 = vadd.xlane.f32.xlu0 %v1550
    %v1552 = vpop.xlane.xlu0 %1551
    %v1553 = vmul.f32 %v1549, %v715
    %v1554 = vmul.f32 %v1552, %v715
    %v1555 = vadd.f32 %v1553, 1e-05
    %v1556 = vadd.f32 %v1554, 1e-05
    %v1557 = vrsqrt.pop %v1555
    %v1558 = vmul.f32 %v1557, %v1555
    %v1559 = vmul.f32 %v1558, %v1557
    %v1560 = vmul.f32 0.5, %v1559
    %v1561 = vsub.f32 1.5, %v1560
    %v1562 = vmul.f32 %v1557, %v1561
    %vm1563 = vweird.f32 %v1555
    %vm1564 = vweird.f32 %v1557
    %vm1565 = vmor %vm1563, %vm1564
    %v1566 = vsel %vm1565, %v1557, %v1562
    %v1567 = vrsqrt.pop %v1556
    %v1568 = vmul.f32 %v1567, %v1556
    %v1569 = vmul.f32 %v1568, %v1567
    %v1570 = vmul.f32 0.5, %v1569
    %v1571 = vsub.f32 1.5, %v1570
    %v1572 = vmul.f32 %v1567, %v1571
    %vm1573 = vweird.f32 %v1556
    %vm1574 = vweird.f32 %v1567
    %vm1575 = vmor %vm1573, %vm1574
    %v1576 = vsel %vm1575, %v1567, %v1572
    %v1577 = vmul.f32 %v1543, %v1566
    %v1578 = vmul.f32 %v1544, %v1576
    %v1579 = vperm.slane %v906, 1
    %v1580 = vmul.f32 %v1577, %v1579
    %v1581 = vmul.f32 %v1578, %v1579
    %v1582 = vperm.slane %v906, 2
    %v1583 = vadd.f32 %v1580, %v1582
    %v1584 = vadd.f32 %v1581, %v1582
    %v1586 = vperm.slane %v895, 0
    %v1589 = vsel %vm74, %v1583, 0
    %v1592 = vsel %vm74, %v1584, 0
    %1594 = vmatpush.msra.mxu0 0.0
    %1595 = vmatpush.msra.mxu0 0.0
    %1596 = vmatpush.msra.mxu0 0.0
    %1597 = vmatpush.msra.mxu0 0.0
    %1598 = vmatpush.msra.mxu0 0.0
    %1599 = vmatpush.msra.mxu0 0.0
    %1600 = vmatpush.msra.mxu0 0.0
    %1601 = vmatpush.msra.mxu0 0.0
    %1602 = vmatpush.msra.mxu0 0.0
    %1603 = vmatpush.msra.mxu0 0.0
    %1604 = vmatpush.msra.mxu0 0.0
    %1605 = vmatpush.msra.mxu0 0.0
    %1606 = vmatpush.msra.mxu0 %v893
    %1607 = vmatpush.msra.mxu0 %v892
    %1608 = vmatpush.msra.mxu0 %v891
    %1609 = vmatpush.msra.mxu0 %v890
    %1610 = vmatmul.f32.gmra.mxu0 %v1589
    %v1611 = vpop.f32.mrf.mxu0
    %v1612 = vadd.f32 %v1586, %v1611
    %1613 = vmatmul.f32.gmra.mxu0 %v1592
    %v1614 = vpop.f32.mrf.mxu0
    %v1615 = vadd.f32 %v1586, %v1614
    %1616 = vdwg.mxu0
    %v1617 = vmax.f32 %v1612, 0.0
    %v1618 = vmax.f32 %v1615, 0.0
    %v1619 = vperm.slane %v906, 3
    %v1621 = vsel %vm795, %v1617, 0
    %v1624 = vsel %vm795, %v1618, 0
    %1626 = vmatpush.msra.mxu0 0.0
    %1627 = vmatpush.msra.mxu0 0.0
    %1628 = vmatpush.msra.mxu0 0.0
    %1629 = vmatpush.msra.mxu0 0.0
    %1630 = vmatpush.msra.mxu0 0.0
    %1631 = vmatpush.msra.mxu0 0.0
    %1632 = vmatpush.msra.mxu0 0.0
    %1633 = vmatpush.msra.mxu0 0.0
    %1634 = vmatpush.msra.mxu0 %v904
    %1635 = vmatpush.msra.mxu0 %v903
    %1636 = vmatpush.msra.mxu0 %v902
    %1637 = vmatpush.msra.mxu0 %v901
    %1638 = vmatpush.msra.mxu0 %v900
    %1639 = vmatpush.msra.mxu0 %v899
    %1640 = vmatpush.msra.mxu0 %v898
    %1641 = vmatpush.msra.mxu0 %v897
    %1642 = vmatmul.f32.gmra.mxu0 %v1621
    %v1643 = vpop.f32.mrf.mxu0
    %v1644 = vadd.f32 %v1619, %v1643
    %1645 = vmatmul.f32.gmra.mxu0 %v1624
    %v1646 = vpop.f32.mrf.mxu0
    %v1647 = vadd.f32 %v1619, %v1646
    %1648 = vdwg.mxu0
    %v1649 = vadd.f32 %v1583, %v1644
    %v1650 = vadd.f32 %v1584, %v1647
    %v1651 = vsel %vm74, %v1649, 0.0
    %1652 = vadd.xlane.f32.xlu0 %v1651
    %v1653 = vpop.xlane.xlu0 %1652
    %v1654 = vsel %vm74, %v1650, 0.0
    %1655 = vadd.xlane.f32.xlu0 %v1654
    %v1656 = vpop.xlane.xlu0 %1655
    %v1657 = vmul.f32 %v1653, %v715
    %v1658 = vmul.f32 %v1656, %v715
    %v1659 = vsub.f32 %v1649, %v1657
    %v1660 = vsub.f32 %v1650, %v1658
    %v1661 = vmul.f32 %v1659, %v1659
    %v1662 = vmul.f32 %v1660, %v1660
    %v1663 = vsel %vm74, %v1661, 0.0
    %1664 = vadd.xlane.f32.xlu0 %v1663
    %v1665 = vpop.xlane.xlu0 %1664
    %v1666 = vsel %vm74, %v1662, 0.0
    %1667 = vadd.xlane.f32.xlu0 %v1666
    %v1668 = vpop.xlane.xlu0 %1667
    %v1669 = vmul.f32 %v1665, %v715
    %v1670 = vmul.f32 %v1668, %v715
    %v1671 = vadd.f32 %v1669, 1e-05
    %v1672 = vadd.f32 %v1670, 1e-05
    %v1673 = vrsqrt.pop %v1671
    %v1674 = vmul.f32 %v1673, %v1671
    %v1675 = vmul.f32 %v1674, %v1673
    %v1676 = vmul.f32 0.5, %v1675
    %v1677 = vsub.f32 1.5, %v1676
    %v1678 = vmul.f32 %v1673, %v1677
    %vm1679 = vweird.f32 %v1671
    %vm1680 = vweird.f32 %v1673
    %vm1681 = vmor %vm1679, %vm1680
    %v1682 = vsel %vm1681, %v1673, %v1678
    %v1683 = vrsqrt.pop %v1672
    %v1684 = vmul.f32 %v1683, %v1672
    %v1685 = vmul.f32 %v1684, %v1683
    %v1686 = vmul.f32 0.5, %v1685
    %v1687 = vsub.f32 1.5, %v1686
    %v1688 = vmul.f32 %v1683, %v1687
    %vm1689 = vweird.f32 %v1672
    %vm1690 = vweird.f32 %v1683
    %vm1691 = vmor %vm1689, %vm1690
    %v1692 = vsel %vm1691, %v1683, %v1688
    %v1693 = vmul.f32 %v1659, %v1682
    %v1694 = vmul.f32 %v1660, %v1692
    %v1695 = vperm.slane %v906, 4
    %v1696 = vmul.f32 %v1693, %v1695
    %v1697 = vmul.f32 %v1694, %v1695
    %v1698 = vperm.slane %v906, 5
    %v1699 = vadd.f32 %v1696, %v1698
    %v1700 = vadd.f32 %v1697, %v1698
    %1701 = vst.msk [vmem:[%s8] sm:$0xff] %vm74, %v1699
    %s1702 = scalar_lea.vmem %s8, 8
    %1703 = vst.msk [vmem:[%s1702] sm:$0xff] %vm74, %v1700
    // Predicated region
    $region38: #{transformer_encoder.1} parent=1 // pred_check
      _
    $region39: #{transformer_encoder.1} parent=1 // pred_check_branch
      %1705 = sbr.rel (0) target = $region41
    $region40: #{transformer_encoder.1} parent=1 // pred_region
      _
    $region41: #{transformer_encoder.1} parent=1 // pred_fallthru
      _
    // Predicated region
    $region42: #{transformer_encoder.1} parent=1 // pred_check
      _
    $region43: #{transformer_encoder.1} parent=1 // pred_check_branch
      %1707 = sbr.rel (0) target = $region45
    $region44: #{transformer_encoder.1} parent=1 // pred_region
      _
    $region45: #{transformer_encoder.1} parent=1 // pred_fallthru
      _
    %1708 = vsyncpa [#allocation3], 1

</llo_original>
